<compile_context>
chip_gen: v6e
topology: v6e:2x2x1
jax: 0.10.0
libtpu: 0.0.40
codegen_flags: <defaults>
</compile_context>

<pallas_src>
import functools

import numpy as np
import jax
import jax.numpy as jnp
from jax.experimental import pallas as pl
from jax.experimental.pallas import tpu as pltpu

NEG_SLOPE = 0.1  # nn.LeakyReLU(negative_slope=0.1) used by the parser's MLP


def _leaky_relu(x):
    return jnp.where(x >= 0, x, NEG_SLOPE * x)


def _pad_to(n, m=128):
    return ((n + m - 1) // m) * m


def _device_kind():
    try:
        return jax.devices()[0].device_kind.lower()
    except Exception:
        return ""


def _vpu_compute_dtype():
    kind = _device_kind()
    # v6e / v7x have bf16 VALUs -> bias add + LeakyReLU in bf16 there;
    # v5e (and unknown parts) keep the f32 elementwise path.
    if "v6" in kind or "v7" in kind:
        return jnp.bfloat16
    return jnp.float32


# ----------------------------------------------------------------------------
# Pallas kernel: fused MLP heads + biaffine attentions + head masking
# ----------------------------------------------------------------------------
def parser_head_kernel(x_ref, mask_ref, wproj_ref, bproj_ref, warc_ref, wrel_ref,
                       s_arc_ref, s_rel_ref, act_ref, *,
                       seq_len, pa_h, pa_d, p_r, rt, compute_dtype):
    S = seq_len
    TBS = x_ref.shape[0]
    TB = TBS // S
    gr = pl.program_id(1)                 # relation-tile index (inner, "arbitrary")

    o1 = pa_h
    o2 = pa_h + pa_d
    o3 = pa_h + pa_d + p_r

    # ---- once per batch tile (first relation-tile step): fused MLP + arc ----
    @pl.when(gr == 0)
    def _():
        xf = x_ref[...]                                          # (TB*S, H2) bf16
        # Fused 4-way MLP projection: one matmul (bf16 in, f32 accumulate).
        proj = jnp.dot(xf, wproj_ref[...], preferred_element_type=jnp.float32)
        proj = proj.astype(compute_dtype) + bproj_ref[...].astype(compute_dtype)
        act = _leaky_relu(proj).astype(jnp.bfloat16)             # (TB*S, P)
        act_ref[...] = act            # reused by every relation tile of this batch tile

        # Arc biaffine: (arc_d @ W_arc) then contraction with arc_h over features.
        arc_h3 = act[:, 0:o1].reshape(TB, S, pa_h)
        arc_d = act[:, o1:o2]
        t_arc = jnp.dot(arc_d, warc_ref[...], preferred_element_type=jnp.float32)
        t_arc3 = t_arc.astype(jnp.bfloat16).reshape(TB, S, pa_h)
        s_arc = jax.lax.dot_general(
            t_arc3, arc_h3, (((2,), (2,)), ((0,), (0,))),
            preferred_element_type=jnp.float32)                  # (TB, S, S)
        m = mask_ref[...]                                        # (TB, 1, S) int32
        s_arc_ref[...] = jnp.where(m > 0, s_arc, -jnp.inf)       # masked_fill(~mask, -inf)

    # ---- every step: rel biaffine for this tile of `rt` relations ----
    rel_h3 = act_ref[:, o2:o3].reshape(TB, S, p_r)
    rel_d = act_ref[:, o3:o3 + p_r]
    # Stage 1 fused across the rt relations: one (TB*S, p_r) @ (p_r, rt*p_r).
    t_rel = jnp.dot(rel_d, wrel_ref[...],
                    preferred_element_type=jnp.float32).astype(jnp.bfloat16)
    # Put the relation index on the M (row) dim of stage 2: rt lane-aligned
    # 128-wide slices -> (TB, rt*S, p_r).  Stage 2 is then ONE batched matmul
    # with M = rt*S instead of rt matmuls with M = S (MXU-utilization fix).
    parts = [t_rel[:, r * p_r:(r + 1) * p_r].reshape(TB, S, p_r) for r in range(rt)]
    t_rel3 = parts[0] if rt == 1 else jnp.concatenate(parts, axis=1)
    s_rel = jax.lax.dot_general(
        t_rel3, rel_h3, (((2,), (2,)), ((0,), (0,))),
        preferred_element_type=jnp.float32)                      # (TB, rt*S, S)
    s_rel_ref[...] = s_rel.astype(s_rel_ref.dtype)               # bf16 store, no reshape
    # TODO(synk): for S < 128 the output last dim is lane-sparse; padding S_head
    # to 128 (sliced in the wrapper) would make the stores fully lane-dense.


# ----------------------------------------------------------------------------
# Tile selection: derive batch/relation tiles + vmem limit from a per-generation
# VMEM budget (v7x has 64 MiB per TensorCore, v5e/v6e have 128 MiB).
# ----------------------------------------------------------------------------
def _estimate_vmem_bytes(tb, rt, S, H2, pa_h, pa_d, p_r):
    P = pa_h + pa_d + 2 * p_r
    rows = tb * S
    byt = 0
    byt += 2 * rows * H2 * 2                        # x block (bf16, double-buffered)
    byt += 2 * tb * S * 4                           # mask block
    byt += 2 * (H2 * P * 2 + P * 4                  # wproj / bproj
                + pa_d * pa_h * 2                   # warc
                + p_r * rt * p_r * 2)               # wrel2d tile
    byt += 2 * rows * S * 4                         # s_arc block (f32)
    byt += 2 * rows * rt * S * 2                    # s_rel block (bf16)
    byt += rows * P * 2                             # act scratch (bf16)
    # transient intermediates: f32 proj, t_arc, t_rel (+bf16 copy & concat), f32 s_rel
    byt += rows * P * 4 + rows * pa_h * 4
    byt += rows * rt * p_r * (4 + 2 + 2) + rows * rt * S * 4
    return byt


def _select_tiles(B, S, n_rels, H2, pa_h, pa_d, p_r):
    kind = _device_kind()
    is_v7 = "v7" in kind
    budget = (48 if is_v7 else 96) * 1024 * 1024
    max_rows = 512 if is_v7 else 1024

    def rows_ok(t):   # BlockSpec (8,128) rule: sublane dim % 8 == 0 or full array dim
        return (t * S) % 8 == 0 or t == B

    cands = [t for t in range(1, B + 1)
             if B % t == 0 and rows_ok(t) and t * S <= max(max_rows, S)]
    if B >= 2:        # keep >= 2 batch-parallel steps so both v7x TCs get work
        halved = [t for t in cands if t <= B // 2]
        cands = halved or cands
    tb = max(cands) if cands else B

    # Relation tile: largest divisor of n_rels whose blocks fit the budget and
    # keep the s_rel block sublane dim (rt*S) divisible by 8 (or full).
    rcands = sorted([r for r in range(1, n_rels + 1)
                     if n_rels % r == 0 and (r == n_rels or (r * S) % 8 == 0)],
                    reverse=True)
    rt = rcands[-1]
    for r in rcands:
        if _estimate_vmem_bytes(tb, r, S, H2, pa_h, pa_d, p_r) <= budget:
            rt = r
            break
    while _estimate_vmem_bytes(tb, rt, S, H2, pa_h, pa_d, p_r) > budget and tb > 1:
        smaller = [t for t in range(1, tb) if B % t == 0 and rows_ok(t)]
        if not smaller:
            break
        tb = max(smaller)

    est = _estimate_vmem_bytes(tb, rt, S, H2, pa_h, pa_d, p_r)
    cap = (56 if is_v7 else 110) * 1024 * 1024
    vmem_limit = int(min(cap, max(32 * 1024 * 1024, est * 3 // 2)))
    return tb, rt, vmem_limit


def parser_head(x_bf16, mask_i32, hw):
    B, S, H2 = x_bf16.shape
    n_rels = hw["n_rels"]
    pa_h, pa_d, p_r = hw["pa_h"], hw["pa_d"], hw["p_r"]
    P = pa_h + pa_d + 2 * p_r

    tb, rt, vmem_limit = _select_tiles(B, S, n_rels, H2, pa_h, pa_d, p_r)
    assert B % tb == 0 and n_rels % rt == 0
    assert (tb * S) % 8 == 0 or tb == B, "batch tile violates (8,128) sublane rule"
    grid = (B // tb, n_rels // rt)            # (batch tiles, relation tiles)

    kernel = functools.partial(
        parser_head_kernel, seq_len=S, pa_h=pa_h, pa_d=pa_d, p_r=p_r, rt=rt,
        compute_dtype=_vpu_compute_dtype())

    x2d = x_bf16.reshape(B * S, H2)           # kernel does no input reshape

    s_arc, s_rel = pl.pallas_call(
        kernel,
        out_shape=(jax.ShapeDtypeStruct((B, S, S), jnp.float32),
                   jax.ShapeDtypeStruct((B, n_rels * S, S), jnp.bfloat16)),
        grid=grid,
        in_specs=[
            pl.BlockSpec((tb * S, H2), lambda gb, gr: (gb, 0)),     # x rows
            pl.BlockSpec((tb, 1, S), lambda gb, gr: (gb, 0, 0)),    # pad mask
            pl.BlockSpec(hw["wproj"].shape, lambda gb, gr: (0, 0)),
            pl.BlockSpec(hw["bproj"].shape, lambda gb, gr: (0, 0)),
            pl.BlockSpec(hw["warc"].shape, lambda gb, gr: (0, 0)),
            pl.BlockSpec((p_r, rt * p_r), lambda gb, gr: (0, gr)),  # rel-tile weights
        ],
        out_specs=(
            pl.BlockSpec((tb, S, S), lambda gb, gr: (gb, 0, 0)),         # resident over gr
            pl.BlockSpec((tb, rt * S, S), lambda gb, gr: (gb, gr, 0)),   # per rel tile
        ),
        scratch_shapes=[pltpu.VMEM((tb * S, P), jnp.bfloat16)],          # cached activations
        compiler_params=pltpu.CompilerParams(
            dimension_semantics=("parallel", "arbitrary"),
            vmem_limit_bytes=vmem_limit),
    )(x2d, mask_i32, hw["wproj"], hw["bproj"], hw["warc"], hw["wrel2d"])
    return s_arc, s_rel


# ----------------------------------------------------------------------------
# Head-weight preparation: fuse the 4 projections, pad lanes to 128, bake the
# biaffine bias-"ones" columns, cast matmul operands to bf16.
# ----------------------------------------------------------------------------
def prepare_head_weights(raw, n_mlp_arc, n_mlp_rel, n_rels):
    A, R = n_mlp_arc, n_mlp_rel
    H2 = raw["wah"].shape[0]
    pa_h, pa_d, p_r = _pad_to(A), _pad_to(A + 1), _pad_to(R + 1)

    def seg(W, b, width, one_col=None):
        Wp = jnp.zeros((H2, width), jnp.float32).at[:, :W.shape[1]].set(W)
        bp = jnp.zeros((width,), jnp.float32).at[:b.shape[0]].set(b)
        if one_col is not None:
            # constant-1 feature (Biaffine bias column): zero weights + bias 1,
            # leaky_relu(1) == 1.  Valid at inference (no MLP dropout).
            bp = bp.at[one_col].set(1.0)
        return Wp, bp

    wah, bah = seg(raw["wah"], raw["bah"], pa_h)                 # arc_h (bias_y=False)
    wad, bad = seg(raw["wad"], raw["bad"], pa_d, one_col=A)      # arc_d (bias_x=True)
    wrh, brh = seg(raw["wrh"], raw["brh"], p_r, one_col=R)       # rel_h (bias_y=True)
    wrd, brd = seg(raw["wrd"], raw["brd"], p_r, one_col=R)       # rel_d (bias_x=True)

    wproj = jnp.concatenate([wah, wad, wrh, wrd], axis=1).astype(jnp.bfloat16)
    bproj = jnp.concatenate([bah, bad, brh, brd])[None, :].astype(jnp.float32)

    warc_p = (jnp.zeros((pa_d, pa_h), jnp.float32)
              .at[:A + 1, :A].set(raw["warc"])).astype(jnp.bfloat16)

    wrel_p = (jnp.zeros((n_rels, p_r, p_r), jnp.float32)
              .at[:, :R + 1, :R + 1].set(raw["wrel"]))
    # (n_rels, p_r, p_r) -> (p_r, n_rels*p_r): fused first-stage rel matmul,
    # columns ordered (relation, feature) so relation tiles are contiguous.
    wrel2d = jnp.transpose(wrel_p, (1, 0, 2)).reshape(p_r, n_rels * p_r).astype(jnp.bfloat16)

    return dict(wproj=wproj, bproj=bproj, warc=warc_p, wrel2d=wrel2d,
                pa_h=pa_h, pa_d=pa_d, p_r=p_r, n_rels=n_rels)


# ----------------------------------------------------------------------------
# BiLSTM in plain JAX (emulates pack_padded_sequence via length masking)
# ----------------------------------------------------------------------------
def lstm_direction(inputs, lens, w_ih, w_hh, b_ih, b_hh, reverse):
    B, S, _ = inputs.shape
    H = w_hh.shape[1]
    # Hoist the time-invariant input projection out of the recurrence: one
    # batched GEMM over all timesteps instead of S tiny per-step GEMMs.
    x_proj = jnp.einsum('bsi,gi->bsg', inputs, w_ih) + (b_ih + b_hh)   # (B, S, 4H)

    ts = jnp.arange(S)
    if reverse:
        ts = ts[::-1]

    def step(carry, t):
        h, c = carry
        gates = jnp.take(x_proj, t, axis=1) + h @ w_hh.T               # (B, 4H)
        i, f, g, o = jnp.split(gates, 4, axis=-1)
        i, f, o = jax.nn.sigmoid(i), jax.nn.sigmoid(f), jax.nn.sigmoid(o)
        g = jnp.tanh(g)
        c_new = f * c + i * g
        h_new = o * jnp.tanh(c_new)
        valid = (t < lens)[:, None]                                    # packed-seq gate
        h = jnp.where(valid, h_new, h)
        c = jnp.where(valid, c_new, c)
        out = jnp.where(valid, h, 0.0)                                 # pad positions -> 0
        return (h, c), out

    (_, _), outs = jax.lax.scan(step, (jnp.zeros((B, H)), jnp.zeros((B, H))), ts)
    outs = jnp.transpose(outs, (1, 0, 2))                              # (B, S, H)
    if reverse:
        outs = outs[:, ::-1, :]
    return outs


def bilstm(x, lens, layers):
    out = x
    for layer in layers:
        fwd = lstm_direction(out, lens, *layer["fwd"], reverse=False)
        bwd = lstm_direction(out, lens, *layer["bwd"], reverse=True)
        out = jnp.concatenate([fwd, bwd], axis=-1)
    return out


# ----------------------------------------------------------------------------
# Full forward
# ----------------------------------------------------------------------------
def encode(words, tags, params, w):
    mask = words != params["pad_index"]                      # (B, S) bool
    lens = mask.sum(axis=1).astype(jnp.int32)

    embed = jnp.take(w["pretrained"], words, axis=0)
    ids = jnp.where(words >= params["n_words"], params["unk_index"], words)
    embed = embed + jnp.take(w["embed"], ids, axis=0)
    tag_embed = jnp.take(w["tag_embed"], tags, axis=0)
    # embed_dropout (IndependentDropout): identity at inference

    x = jnp.concatenate([embed, tag_embed], axis=-1)
    # sort / pack_padded_sequence / unsort is order-invariant once the LSTM
    # masks by length, so it is omitted (same outputs).
    x = bilstm(x, lens, w["lstm"])                           # (B, S, 2*n_lstm_hidden)
    # lstm_dropout (SharedDropout): identity at inference
    return x, mask


def biaffine_parser_forward(words, tags, params, w, head_w, native_rel_layout=False):
    x, mask = encode(words, tags, params, w)
    mask_i32 = mask.astype(jnp.int32)[:, None, :]            # (B, 1, S)
    s_arc, s_rel_native = parser_head(x.astype(jnp.bfloat16), mask_i32, head_w)
    if native_rel_layout:
        # Kernel-native bf16 layout (B, n_rels*S_dep... = n_rels*S rows, S_head):
        # preferred for fused downstream consumers (no extra HBM round-trip).
        return s_arc, s_rel_native
    B, S = words.shape
    n_rels = head_w["n_rels"]
    # torch API parity: rel_attn(...).permute(0, 2, 3, 1) -> (B, S_dep, S_head, n_rels).
    # NOTE: this transpose re-reads/writes the largest tensor; keep it in the
    # wrapper only and prefer native_rel_layout=True in production pipelines.
    s_rel = jnp.transpose(s_rel_native.reshape(B, n_rels, S, S), (0, 2, 3, 1))
    return s_arc, s_rel.astype(jnp.float32)


# ----------------------------------------------------------------------------
# Pure-JAX f32 reference for the head (validates fusion / padding / bf16)
# ----------------------------------------------------------------------------
def reference_head(x, mask, w):
    arc_h = _leaky_relu(x @ w["wah"] + w["bah"])
    arc_d = _leaky_relu(x @ w["wad"] + w["bad"])
    rel_h = _leaky_relu(x @ w["wrh"] + w["brh"])
    rel_d = _leaky_relu(x @ w["wrd"] + w["brd"])
    ones = jnp.ones(arc_d.shape[:-1] + (1,), x.dtype)
    arc_d = jnp.concatenate([arc_d, ones], -1)
    rel_h = jnp.concatenate([rel_h, ones], -1)
    rel_d = jnp.concatenate([rel_d, ones], -1)
    s_arc = jnp.einsum('bia,ac,bjc->bij', arc_d, w["warc"], arc_h)
    s_rel = jnp.einsum('bia,rac,bjc->bijr', rel_d, w["wrel"], rel_h)
    s_arc = jnp.where(mask[:, None, :], s_arc, -jnp.inf)
    return s_arc, s_rel


# ----------------------------------------------------------------------------
# Deterministic synthetic parameter / input construction
# ----------------------------------------------------------------------------
def build_weights(key, params):
    n_embed = params["n_embed"]
    n_tag = params["n_tag_embed"]
    H = params["n_lstm_hidden"]
    H2 = 2 * H
    A, R = params["n_mlp_arc"], params["n_mlp_rel"]
    n_rels = params["n_rels"]

    def nrm(k, shape, std=0.1):
        return (std * jax.random.normal(k, shape)).astype(jnp.float32)

    keys = iter(jax.random.split(key, 40))
    w = {}
    w["pretrained"] = nrm(next(keys), (params["n_pretrained"], n_embed))
    w["embed"] = jnp.zeros((params["n_words"], n_embed), jnp.float32)  # reset_parameters: zeros_
    w["tag_embed"] = nrm(next(keys), (params["n_tags"], n_tag))

    lstm = []
    in_size = n_embed + n_tag
    for _ in range(params["n_lstm_layers"]):
        layer = {}
        for d in ("fwd", "bwd"):
            layer[d] = (nrm(next(keys), (4 * H, in_size)),
                        nrm(next(keys), (4 * H, H)),
                        nrm(next(keys), (4 * H,)),
                        nrm(next(keys), (4 * H,)))
        lstm.append(layer)
        in_size = H2
    w["lstm"] = lstm

    # MLP heads (raw, torch-shaped) + biaffine weights.
    w["wah"], w["bah"] = nrm(next(keys), (H2, A)), nrm(next(keys), (A,))
    w["wad"], w["bad"] = nrm(next(keys), (H2, A)), nrm(next(keys), (A,))
    w["wrh"], w["brh"] = nrm(next(keys), (H2, R)), nrm(next(keys), (R,))
    w["wrd"], w["brd"] = nrm(next(keys), (H2, R)), nrm(next(keys), (R,))
    w["warc"] = nrm(next(keys), (A + 1, A))                  # Biaffine(A, 1, bias_x=True)
    w["wrel"] = nrm(next(keys), (n_rels, R + 1, R + 1))      # Biaffine(R, n_rels, bias_x/y=True)
    return w


if __name__ == "__main__":
    params = dict(
        n_words=50, n_pretrained=60, n_embed=32,
        n_tags=10, n_tag_embed=16,
        n_lstm_hidden=32, n_lstm_layers=2,
        n_mlp_arc=64, n_mlp_rel=32, n_rels=4,
        pad_index=0, unk_index=1,
        embed_dropout=0.33, lstm_dropout=0.33, mlp_dropout=0.33,
    )
    B, S = 2, 8

    key = jax.random.PRNGKey(0)
    k_w, k_words, k_tags = jax.random.split(key, 3)
    weights = build_weights(k_w, params)
    head_w = prepare_head_weights(weights, params["n_mlp_arc"],
                                  params["n_mlp_rel"], params["n_rels"])

    words = jax.random.randint(k_words, (B, S), 2, params["n_pretrained"], dtype=jnp.int32)
    words = words.at[0, 6:].set(0)       # pad_index = 0 -> differing lengths
    words = words.at[1, 4:].set(0)
    tags = jax.random.randint(k_tags, (B, S), 0, params["n_tags"], dtype=jnp.int32)

    s_arc, s_rel = biaffine_parser_forward(words, tags, params, weights, head_w)
    jax.block_until_ready((s_arc, s_rel))

    assert s_arc.shape == (B, S, S)
    assert s_rel.shape == (B, S, S, params["n_rels"])

    # Cross-check against an f32 plain-JAX reference using the RAW (unfused,
    # unpadded) weights; tolerance accounts for bf16 MXU operands + bf16 s_rel.
    x_enc, mask = encode(words, tags, params, weights)
    ref_arc, ref_rel = reference_head(x_enc, mask, weights)
    assert np.allclose(np.asarray(s_arc), np.asarray(ref_arc), rtol=5e-2, atol=2e-2)
    assert np.allclose(np.asarray(s_rel, dtype=np.float32), np.asarray(ref_rel),
                       rtol=5e-2, atol=2e-2)

    # TODO(synk): training-mode dropout (IndependentDropout / SharedDropout / MLP
    # dropout) not modeled; the bias-1 column trick is inference-only.
    print("KERNEL_OK")
</pallas_src>

<mosaic_0001>
module attributes {stable_mosaic.version = 11 : i64} {
  func.func @parser_head_kernel(%arg0: i32, %arg1: i32, %arg2: memref<8x64xbf16, #tpu.memory_space<vmem>>, %arg3: memref<1x1x8xi32, #tpu.memory_space<vmem>>, %arg4: memref<64x512xbf16, #tpu.memory_space<vmem>>, %arg5: memref<1x512xf32, #tpu.memory_space<vmem>>, %arg6: memref<128x128xbf16, #tpu.memory_space<vmem>>, %arg7: memref<128x512xbf16, #tpu.memory_space<vmem>>, %arg8: memref<1x8x8xf32, #tpu.memory_space<vmem>>, %arg9: memref<1x32x8xbf16, #tpu.memory_space<vmem>>, %arg10: memref<8x512xbf16, #tpu.memory_space<vmem>>) attributes {dimension_semantics = [#tpu.dimension_semantics<parallel>, #tpu.dimension_semantics<arbitrary>], iteration_bounds = array<i64: 2, 1>, scalar_prefetch = 0 : i64, scratch_operands = 1 : i64, tpu.core_type = #tpu.core_type<tc>, window_params = [{transform_indices = @transform_0, window_bounds = array<i64: 8, 64>}, {transform_indices = @transform_1, window_bounds = array<i64: 1, 1, 8>}, {pipeline_mode = #tpu.pipeline_mode<synchronous>, transform_indices = @transform_2, window_bounds = array<i64: 64, 512>}, {pipeline_mode = #tpu.pipeline_mode<synchronous>, transform_indices = @transform_3, window_bounds = array<i64: 1, 512>}, {pipeline_mode = #tpu.pipeline_mode<synchronous>, transform_indices = @transform_4, window_bounds = array<i64: 128, 128>}, {transform_indices = @transform_5, window_bounds = array<i64: 128, 512>}, {transform_indices = @transform_6, window_bounds = array<i64: 1, 8, 8>}, {transform_indices = @transform_7, window_bounds = array<i64: 1, 32, 8>}]} {
    %c0_i32 = arith.constant 0 : i32
    %0 = arith.cmpi eq, %arg1, %c0_i32 : i32
    %1 = arith.extui %0 : i1 to i32
    %c0_i32_0 = arith.constant 0 : i32
    %2 = arith.cmpi ne, %1, %c0_i32_0 : i32
    scf.if %2 {
      %c0_8 = arith.constant 0 : index
      %c0_9 = arith.constant 0 : index
      %21 = vector.load %arg2[%c0_8, %c0_9] : memref<8x64xbf16, #tpu.memory_space<vmem>>, vector<8x64xbf16>
      %c0_10 = arith.constant 0 : index
      %c0_11 = arith.constant 0 : index
      %22 = vector.load %arg4[%c0_10, %c0_11] : memref<64x512xbf16, #tpu.memory_space<vmem>>, vector<64x512xbf16>
      %cst_12 = arith.constant dense<0.000000e+00> : vector<8x512xf32>
      %23 = tpu.matmul %21, %22, %cst_12 {dimension_numbers = #tpu.dot_dimension_numbers<[1], [0], [0], [1], [0, 0, 1, 1], [], []>} : vector<8x64xbf16>, vector<64x512xbf16>, vector<8x512xf32> -> vector<8x512xf32>
      %c0_13 = arith.constant 0 : index
      %c0_14 = arith.constant 0 : index
      %24 = vector.load %arg5[%c0_13, %c0_14] : memref<1x512xf32, #tpu.memory_space<vmem>>, vector<1x512xf32>
      %25 = vector.broadcast %24 : vector<1x512xf32> to vector<8x512xf32>
      %26 = arith.addf %23, %25 : vector<8x512xf32>
      %cst_15 = arith.constant 0.000000e+00 : f32
      %27 = vector.broadcast %cst_15 : f32 to vector<8x512xf32>
      %28 = arith.cmpf oge, %26, %27 : vector<8x512xf32>
      %cst_16 = arith.constant 1.000000e-01 : f32
      %29 = vector.broadcast %cst_16 : f32 to vector<8x512xf32>
      %30 = arith.mulf %29, %26 : vector<8x512xf32>
      %31 = arith.select %28, %26, %30 : vector<8x512xi1>, vector<8x512xf32>
      %32 = arith.truncf %31 : vector<8x512xf32> to vector<8x512xbf16>
      %c0_17 = arith.constant 0 : index
      %c0_18 = arith.constant 0 : index
      %33 = vector.load %arg10[%c0_17, %c0_18] : memref<8x512xbf16, #tpu.memory_space<vmem>>, vector<8x512xbf16>
      tpu.vector_store %arg10[%c0_17, %c0_18], %32 {strides = array<i32>} : memref<8x512xbf16, #tpu.memory_space<vmem>>, vector<8x512xbf16>,
      %34 = vector.extract_strided_slice %32 {offsets = [0, 0], sizes = [8, 128], strides = [1, 1]} : vector<8x512xbf16> to vector<8x128xbf16>
      %35 = vector.shape_cast %34 : vector<8x128xbf16> to vector<1x8x128xbf16>
      %36 = vector.extract_strided_slice %32 {offsets = [0, 128], sizes = [8, 128], strides = [1, 1]} : vector<8x512xbf16> to vector<8x128xbf16>
      %c0_19 = arith.constant 0 : index
      %c0_20 = arith.constant 0 : index
      %37 = vector.load %arg6[%c0_19, %c0_20] : memref<128x128xbf16, #tpu.memory_space<vmem>>, vector<128x128xbf16>
      %cst_21 = arith.constant dense<0.000000e+00> : vector<8x128xf32>
      %38 = tpu.matmul %36, %37, %cst_21 {dimension_numbers = #tpu.dot_dimension_numbers<[1], [0], [0], [1], [0, 0, 1, 1], [], []>} : vector<8x128xbf16>, vector<128x128xbf16>, vector<8x128xf32> -> vector<8x128xf32>
      %39 = arith.truncf %38 : vector<8x128xf32> to vector<8x128xbf16>
      %40 = vector.shape_cast %39 : vector<8x128xbf16> to vector<1x8x128xbf16>
      %cst_22 = arith.constant dense<0.000000e+00> : vector<1x8x8xf32>
      %41 = tpu.matmul %40, %35, %cst_22 {dimension_numbers = #tpu.dot_dimension_numbers<[2], [2], [1], [1], [0, 0, 0, 1, 1, 1], [0], [0]>} : vector<1x8x128xbf16>, vector<1x8x128xbf16>, vector<1x8x8xf32> -> vector<1x8x8xf32>
      %c0_23 = arith.constant 0 : index
      %c0_24 = arith.constant 0 : index
      %c0_25 = arith.constant 0 : index
      %42 = vector.load %arg3[%c0_23, %c0_24, %c0_25] : memref<1x1x8xi32, #tpu.memory_space<vmem>>, vector<1x1x8xi32>
      %c0_i32_26 = arith.constant 0 : i32
      %43 = vector.broadcast %c0_i32_26 : i32 to vector<1x1x8xi32>
      %44 = arith.cmpi sgt, %42, %43 : vector<1x1x8xi32>
      %cst_27 = arith.constant 0xFF800000 : f32
      %45 = vector.shape_cast %44 : vector<1x1x8xi1> to vector<1x1x8xi1>
      %46 = vector.broadcast %45 : vector<1x1x8xi1> to vector<1x8x8xi1>
      %47 = vector.broadcast %cst_27 : f32 to vector<1x8x8xf32>
      %48 = arith.select %46, %41, %47 : vector<1x8x8xi1>, vector<1x8x8xf32>
      %c0_28 = arith.constant 0 : index
      %c0_29 = arith.constant 0 : index
      %c0_30 = arith.constant 0 : index
      %49 = vector.load %arg8[%c0_28, %c0_29, %c0_30] : memref<1x8x8xf32, #tpu.memory_space<vmem>>, vector<1x8x8xf32>
      tpu.vector_store %arg8[%c0_28, %c0_29, %c0_30], %48 {strides = array<i32>} : memref<1x8x8xf32, #tpu.memory_space<vmem>>, vector<1x8x8xf32>,
    } else {
    }
    %c0 = arith.constant 0 : index
    %c256 = arith.constant 256 : index
    %3 = vector.load %arg10[%c0, %c256] : memref<8x512xbf16, #tpu.memory_space<vmem>>, vector<8x128xbf16>
    %4 = vector.shape_cast %3 : vector<8x128xbf16> to vector<1x8x128xbf16>
    %c0_1 = arith.constant 0 : index
    %c384 = arith.constant 384 : index
    %5 = vector.load %arg10[%c0_1, %c384] : memref<8x512xbf16, #tpu.memory_space<vmem>>, vector<8x128xbf16>
    %c0_2 = arith.constant 0 : index
    %c0_3 = arith.constant 0 : index
    %6 = vector.load %arg7[%c0_2, %c0_3] : memref<128x512xbf16, #tpu.memory_space<vmem>>, vector<128x512xbf16>
    %cst = arith.constant dense<0.000000e+00> : vector<8x512xf32>
    %7 = tpu.matmul %5, %6, %cst {dimension_numbers = #tpu.dot_dimension_numbers<[1], [0], [0], [1], [0, 0, 1, 1], [], []>} : vector<8x128xbf16>, vector<128x512xbf16>, vector<8x512xf32> -> vector<8x512xf32>
    %8 = arith.truncf %7 : vector<8x512xf32> to vector<8x512xbf16>
    %9 = vector.extract_strided_slice %8 {offsets = [0, 0], sizes = [8, 128], strides = [1, 1]} : vector<8x512xbf16> to vector<8x128xbf16>
    %10 = vector.shape_cast %9 : vector<8x128xbf16> to vector<1x8x128xbf16>
    %11 = vector.extract_strided_slice %8 {offsets = [0, 128], sizes = [8, 128], strides = [1, 1]} : vector<8x512xbf16> to vector<8x128xbf16>
    %12 = vector.shape_cast %11 : vector<8x128xbf16> to vector<1x8x128xbf16>
    %13 = vector.extract_strided_slice %8 {offsets = [0, 256], sizes = [8, 128], strides = [1, 1]} : vector<8x512xbf16> to vector<8x128xbf16>
    %14 = vector.shape_cast %13 : vector<8x128xbf16> to vector<1x8x128xbf16>
    %15 = vector.extract_strided_slice %8 {offsets = [0, 384], sizes = [8, 128], strides = [1, 1]} : vector<8x512xbf16> to vector<8x128xbf16>
    %16 = vector.shape_cast %15 : vector<8x128xbf16> to vector<1x8x128xbf16>
    %17 = tpu.concatenate %10, %12, %14, %16 in 1 : vector<1x8x128xbf16>, vector<1x8x128xbf16>, vector<1x8x128xbf16>, vector<1x8x128xbf16> -> vector<1x32x128xbf16>
    %cst_4 = arith.constant dense<0.000000e+00> : vector<1x32x8xf32>
    %18 = tpu.matmul %17, %4, %cst_4 {dimension_numbers = #tpu.dot_dimension_numbers<[2], [2], [1], [1], [0, 0, 0, 1, 1, 1], [0], [0]>} : vector<1x32x128xbf16>, vector<1x8x128xbf16>, vector<1x32x8xf32> -> vector<1x32x8xf32>
    %19 = arith.truncf %18 : vector<1x32x8xf32> to vector<1x32x8xbf16>
    %c0_5 = arith.constant 0 : index
    %c0_6 = arith.constant 0 : index
    %c0_7 = arith.constant 0 : index
    %20 = vector.load %arg9[%c0_5, %c0_6, %c0_7] : memref<1x32x8xbf16, #tpu.memory_space<vmem>>, vector<1x32x8xbf16>
    tpu.vector_store %arg9[%c0_5, %c0_6, %c0_7], %19 {strides = array<i32>} : memref<1x32x8xbf16, #tpu.memory_space<vmem>>, vector<1x32x8xbf16>,
    return
  }
  func.func @transform_0(%arg0: i32, %arg1: i32) -> (i32, i32) {
    %c0_i32 = arith.constant 0 : i32
    %c0_i32_0 = arith.constant 0 : i32
    return %arg0, %c0_i32 : i32, i32
  }
  func.func @transform_1(%arg0: i32, %arg1: i32) -> (i32, i32, i32) {
    %c0_i32 = arith.constant 0 : i32
    %c0_i32_0 = arith.constant 0 : i32
    %c0_i32_1 = arith.constant 0 : i32
    return %arg0, %c0_i32, %c0_i32_0 : i32, i32, i32
  }
  func.func @transform_2(%arg0: i32, %arg1: i32) -> (i32, i32) {
    %c0_i32 = arith.constant 0 : i32
    %c0_i32_0 = arith.constant 0 : i32
    %c0_i32_1 = arith.constant 0 : i32
    return %c0_i32, %c0_i32_0 : i32, i32
  }
  func.func @transform_3(%arg0: i32, %arg1: i32) -> (i32, i32) {
    %c0_i32 = arith.constant 0 : i32
    %c0_i32_0 = arith.constant 0 : i32
    %c0_i32_1 = arith.constant 0 : i32
    return %c0_i32, %c0_i32_0 : i32, i32
  }
  func.func @transform_4(%arg0: i32, %arg1: i32) -> (i32, i32) {
    %c0_i32 = arith.constant 0 : i32
    %c0_i32_0 = arith.constant 0 : i32
    %c0_i32_1 = arith.constant 0 : i32
    return %c0_i32, %c0_i32_0 : i32, i32
  }
  func.func @transform_5(%arg0: i32, %arg1: i32) -> (i32, i32) {
    %c0_i32 = arith.constant 0 : i32
    %c0_i32_0 = arith.constant 0 : i32
    return %c0_i32, %arg1 : i32, i32
  }
  func.func @transform_6(%arg0: i32, %arg1: i32) -> (i32, i32, i32) {
    %c0_i32 = arith.constant 0 : i32
    %c0_i32_0 = arith.constant 0 : i32
    %c0_i32_1 = arith.constant 0 : i32
    return %arg0, %c0_i32, %c0_i32_0 : i32, i32, i32
  }
  func.func @transform_7(%arg0: i32, %arg1: i32) -> (i32, i32, i32) {
    %c0_i32 = arith.constant 0 : i32
    %c0_i32_0 = arith.constant 0 : i32
    return %arg0, %arg1, %c0_i32 : i32, i32, i32
  }
}

</mosaic_0001>

<llo_original>
// kernel: tpu_custom_call.1
$region0: #{tpu_custom_call.1}
  #allocation0 [shape = 'u32[]', space=smem, size = 0x4, offset = 0x4, fixed_abs, tag = 'smem constant byte address 0x4 - core index']
  #allocation1 [shape = 'u32[144,128]{1,0:T(1,128)}', space=vmem, size = 0x12000, scoped, tag = 'internal scratch']
  #allocation2 [shape = 'bf16[8,512]{1,0:T(8,128)(2,1)}', space=vmem, size = 0x2000, scoped, tag = 'scratch operand']
  %s0 = inlined_call_operand.hbm [shape: bf16[16,64], index: 0, kind: input, shape index: {}]
  %s1 = inlined_call_operand.hbm [shape: s32[2,1,8], index: 1, kind: input, shape index: {}]
  %s2 = inlined_call_operand.hbm [shape: bf16[64,512], index: 2, kind: input, shape index: {}]
  %s3 = inlined_call_operand.vmem [shape: f32[1,512], index: 3, kind: input, shape index: {}]
  %s4 = inlined_call_operand.hbm [shape: bf16[128,128], index: 4, kind: input, shape index: {}]
  %s5 = inlined_call_operand.hbm [shape: bf16[128,512], index: 5, kind: input, shape index: {}]
  %s6 = inlined_call_operand.hbm [shape: f32[2,8,8], index: 6, kind: output, shape index: {0}]
  %s7 = inlined_call_operand.vmem [shape: bf16[2,32,8], index: 7, kind: output, shape index: {1}]
  %8 = xla_tuple %s6, %s7
  %s9 = sld [smem:[#allocation0]]
  $region89: #{tpu_custom_call.1} parent=0
    _
  %s11 = ssub.s32 1, %s9
  %s12 = scalar_select 0, %s11, %s9
  $region1: #{tpu_custom_call.1} parent=0
    #allocation3 [shape = 'u8[4096]{0}', space=vmem, size = 0x1000, scoped, tag = 'input window, operand 0']
    #allocation4 [shape = 's32[2]{0}', space=sflag, size = 0x8, scoped, tag = 'scoped memory for tpu_custom_call.1']
    #allocation5 [shape = 's32[2]{0}', space=sflag, size = 0x8, scoped, tag = 'scoped memory for tpu_custom_call.1']
    #allocation6 [shape = 'u8[1024]{0}', space=vmem, size = 0x400, scoped, tag = 'input window, operand 1']
    #allocation7 [shape = 's32[2]{0}', space=sflag, size = 0x8, scoped, tag = 'scoped memory for tpu_custom_call.1']
    #allocation8 [shape = 'u8[65536]{0}', space=vmem, size = 0x10000, scoped, tag = 'input window, operand 2, single buffered']
    #allocation9 [shape = 'u8[32768]{0}', space=vmem, size = 0x8000, scoped, tag = 'input window, operand 4, single buffered']
    #allocation10 [shape = 's32[1]{0}', space=sflag, size = 0x4, scoped, tag = 'scoped memory for tpu_custom_call.1']
    #allocation11 [shape = 'u8[131072]{0}', space=vmem, size = 0x20000, scoped, tag = 'input window, operand 5, single buffered']
    #allocation12 [shape = 'u8[8192]{0}', space=vmem, size = 0x2000, scoped, tag = 'output window, operand 0']
    %13 = vsyncpa [#allocation4], 0
    %s14 = scalar_lea.sflag [#allocation4], 1
    %15 = vsyncpa %s14, 0
    %16 = vsyncpa [#allocation7], 0
    %s17 = scalar_lea.sflag [#allocation7], 1
    %18 = vsyncpa %s17, 0
    %19 = vsyncpa [#allocation10], 0
    %20 = vsyncpa [#allocation5], 0
    %s21 = scalar_lea.sflag [#allocation5], 1
    %22 = vsyncpa %s21, 0
    loop: start=0, step=1, limit=4
    $region2: #{tpu_custom_call.1} parent=1 // loop_pre_header
      _
    $region3: #{tpu_custom_call.1} parent=1 // loop_header
      %s24 = sphi 0, %s28
      %p25 = scmp.ge.s32.totalorder %s24, 4
      %s31 = sphi 0, %s43
      %s32 = sphi 0, %s39
      %s33 = sphi 0, %s31
      %s34 = sphi 0, %s32
      %s35 = sphi 0, %s33
      %s36 = sphi 0, %s34
      %s46 = sphi 0, %s48
      %s49 = sphi 0, %s46
      %s50 = sphi 0, %s49
      %s66 = sphi 0, %s50
      %s72 = sphi 0, %s74
      %s75 = sphi 0, %s72
      %s76 = sphi 0, %s75
      %s92 = sphi 0, %s76
      %s96 = sphi 0, %s96
      %s98 = sphi 0, %s96
      %s99 = sphi 0, %s98
      %s113 = sphi 0, %s99
      %s117 = sphi 0, %s117
      %s119 = sphi 0, %s117
      %s120 = sphi 0, %s119
      %s134 = sphi 0, %s120
      %s138 = sphi 0, %s138
      %s140 = sphi 0, %s138
      %s141 = sphi 0, %s140
      %s155 = sphi 0, %s141
      %s161 = sphi 0, %s163
      %s164 = sphi 0, %s161
      %s165 = sphi 0, %s164
      %s181 = sphi 0, %s165
      %s187 = sphi 0, %s189
      %s190 = sphi 0, %s187
      %s191 = sphi 0, %s190
      %s207 = sphi 0, %s191
      %s215 = sphi 0, %s217
      %s218 = sphi 0, %s215
      %s219 = sphi 0, %s218
      %s235 = sphi 0, %s219
    $region4: #{tpu_custom_call.1} parent=1 // loop_header_branch
      %27 = sbr.rel (%p25) target = $region8
    $region5: #{tpu_custom_call.1} parent=1 // loop_body
      %s29 = ssub.s32 %s24, 1
      %s30 = ssub.s32 %s24, 2
      %s37 = sadd.s32 1, %s32
      %p38 = scmp.ge.s32.totalorder %s37, 1
      %s39 = scalar_select %p38, 0, %s37
      %s40 = sadd.s32 1, %s31
      %s41 = scalar_select %p38, %s40, %s31
      %p42 = scmp.ge.s32.totalorder %s41, 2
      %s43 = scalar_select %p42, 0, %s41
      %s44 = ssub.s32 %s31, %s43
      %p45 = scmp.eq.s32.totalorder %s44, 0
      %s47 = sadd.s32 %s46, 1
      %s48 = scalar_select %p45, %s46, %s47
      %p51 = pneg %p45
      %p52 = scmp.eq.s32.totalorder %s24, 1
      %p53 = por %p51, %p52
      %p54 = scmp.ne.s32.totalorder %s46, %s49
      %p55 = scmp.eq.s32.totalorder %s24, 0
      %p56 = por %p54, %p55
      %p57 = scmp.ne.s32.totalorder %s46, %s49
      %p58 = scmp.eq.s32.totalorder %s29, 1
      %p59 = por %p57, %p58
      %p60 = scmp.ne.s32.totalorder %s49, %s50
      %p61 = scmp.eq.s32.totalorder %s29, 0
      %p62 = por %p60, %p61
      %p63 = scmp.ne.s32.totalorder %s49, %s50
      %p64 = scmp.eq.s32.totalorder %s30, 1
      %p65 = por %p63, %p64
      %p67 = scmp.ne.s32.totalorder %s50, %s66
      %p68 = scmp.eq.s32.totalorder %s30, 0
      %p69 = por %p67, %p68
      %s70 = ssub.s32 %s31, %s43
      %p71 = scmp.eq.s32.totalorder %s70, 0
      %s73 = sadd.s32 %s72, 1
      %s74 = scalar_select %p71, %s72, %s73
      %p77 = pneg %p71
      %p78 = scmp.eq.s32.totalorder %s24, 1
      %p79 = por %p77, %p78
      %p80 = scmp.ne.s32.totalorder %s72, %s75
      %p81 = scmp.eq.s32.totalorder %s24, 0
      %p82 = por %p80, %p81
      %p83 = scmp.ne.s32.totalorder %s72, %s75
      %p84 = scmp.eq.s32.totalorder %s29, 1
      %p85 = por %p83, %p84
      %p86 = scmp.ne.s32.totalorder %s75, %s76
      %p87 = scmp.eq.s32.totalorder %s29, 0
      %p88 = por %p86, %p87
      %p89 = scmp.ne.s32.totalorder %s75, %s76
      %p90 = scmp.eq.s32.totalorder %s30, 1
      %p91 = por %p89, %p90
      %p93 = scmp.ne.s32.totalorder %s76, %s92
      %p94 = scmp.eq.s32.totalorder %s30, 0
      %p95 = por %p93, %p94
      %s97 = sadd.s32 %s96, 1
      %p100 = scmp.eq.s32.totalorder %s24, 1
      %p101 = scmp.ne.s32.totalorder %s96, %s98
      %p102 = scmp.eq.s32.totalorder %s24, 0
      %p103 = por %p101, %p102
      %p104 = scmp.ne.s32.totalorder %s96, %s98
      %p105 = scmp.eq.s32.totalorder %s29, 1
      %p106 = por %p104, %p105
      %p107 = scmp.ne.s32.totalorder %s98, %s99
      %p108 = scmp.eq.s32.totalorder %s29, 0
      %p109 = por %p107, %p108
      %p110 = scmp.ne.s32.totalorder %s98, %s99
      %p111 = scmp.eq.s32.totalorder %s30, 1
      %p112 = por %p110, %p111
      %p114 = scmp.ne.s32.totalorder %s99, %s113
      %p115 = scmp.eq.s32.totalorder %s30, 0
      %p116 = por %p114, %p115
      %s118 = sadd.s32 %s117, 1
      %p121 = scmp.eq.s32.totalorder %s24, 1
      %p122 = scmp.ne.s32.totalorder %s117, %s119
      %p123 = scmp.eq.s32.totalorder %s24, 0
      %p124 = por %p122, %p123
      %p125 = scmp.ne.s32.totalorder %s117, %s119
      %p126 = scmp.eq.s32.totalorder %s29, 1
      %p127 = por %p125, %p126
      %p128 = scmp.ne.s32.totalorder %s119, %s120
      %p129 = scmp.eq.s32.totalorder %s29, 0
      %p130 = por %p128, %p129
      %p131 = scmp.ne.s32.totalorder %s119, %s120
      %p132 = scmp.eq.s32.totalorder %s30, 1
      %p133 = por %p131, %p132
      %p135 = scmp.ne.s32.totalorder %s120, %s134
      %p136 = scmp.eq.s32.totalorder %s30, 0
      %p137 = por %p135, %p136
      %s139 = sadd.s32 %s138, 1
      %p142 = scmp.eq.s32.totalorder %s24, 1
      %p143 = scmp.ne.s32.totalorder %s138, %s140
      %p144 = scmp.eq.s32.totalorder %s24, 0
      %p145 = por %p143, %p144
      %p146 = scmp.ne.s32.totalorder %s138, %s140
      %p147 = scmp.eq.s32.totalorder %s29, 1
      %p148 = por %p146, %p147
      %p149 = scmp.ne.s32.totalorder %s140, %s141
      %p150 = scmp.eq.s32.totalorder %s29, 0
      %p151 = por %p149, %p150
      %p152 = scmp.ne.s32.totalorder %s140, %s141
      %p153 = scmp.eq.s32.totalorder %s30, 1
      %p154 = por %p152, %p153
      %p156 = scmp.ne.s32.totalorder %s141, %s155
      %p157 = scmp.eq.s32.totalorder %s30, 0
      %p158 = por %p156, %p157
      %s159 = ssub.s32 %s32, %s39
      %p160 = scmp.eq.s32.totalorder %s159, 0
      %s162 = sadd.s32 %s161, 1
      %s163 = scalar_select %p160, %s161, %s162
      %p166 = pneg %p160
      %p167 = scmp.eq.s32.totalorder %s24, 1
      %p168 = por %p166, %p167
      %p169 = scmp.ne.s32.totalorder %s161, %s164
      %p170 = scmp.eq.s32.totalorder %s24, 0
      %p171 = por %p169, %p170
      %p172 = scmp.ne.s32.totalorder %s161, %s164
      %p173 = scmp.eq.s32.totalorder %s29, 1
      %p174 = por %p172, %p173
      %p175 = scmp.ne.s32.totalorder %s164, %s165
      %p176 = scmp.eq.s32.totalorder %s29, 0
      %p177 = por %p175, %p176
      %p178 = scmp.ne.s32.totalorder %s164, %s165
      %p179 = scmp.eq.s32.totalorder %s30, 1
      %p180 = por %p178, %p179
      %p182 = scmp.ne.s32.totalorder %s165, %s181
      %p183 = scmp.eq.s32.totalorder %s30, 0
      %p184 = por %p182, %p183
      %s185 = ssub.s32 %s31, %s43
      %p186 = scmp.eq.s32.totalorder %s185, 0
      %s188 = sadd.s32 %s187, 1
      %s189 = scalar_select %p186, %s187, %s188
      %p192 = pneg %p186
      %p193 = scmp.eq.s32.totalorder %s24, 1
      %p194 = por %p192, %p193
      %p195 = scmp.ne.s32.totalorder %s187, %s190
      %p196 = scmp.eq.s32.totalorder %s24, 0
      %p197 = por %p195, %p196
      %p198 = scmp.ne.s32.totalorder %s187, %s190
      %p199 = scmp.eq.s32.totalorder %s29, 1
      %p200 = por %p198, %p199
      %p201 = scmp.ne.s32.totalorder %s190, %s191
      %p202 = scmp.eq.s32.totalorder %s29, 0
      %p203 = por %p201, %p202
      %p204 = scmp.ne.s32.totalorder %s190, %s191
      %p205 = scmp.eq.s32.totalorder %s30, 1
      %p206 = por %p204, %p205
      %p208 = scmp.ne.s32.totalorder %s191, %s207
      %p209 = scmp.eq.s32.totalorder %s30, 0
      %p210 = por %p208, %p209
      %s211 = ssub.s32 %s31, %s43
      %s212 = ssub.s32 %s32, %s39
      %s213 = sor.u32 %s211, %s212
      %p214 = scmp.eq.s32.totalorder %s213, 0
      %s216 = sadd.s32 %s215, 1
      %s217 = scalar_select %p214, %s215, %s216
      %p220 = pneg %p214
      %p221 = scmp.eq.s32.totalorder %s24, 1
      %p222 = por %p220, %p221
      %p223 = scmp.ne.s32.totalorder %s215, %s218
      %p224 = scmp.eq.s32.totalorder %s24, 0
      %p225 = por %p223, %p224
      %p226 = scmp.ne.s32.totalorder %s215, %s218
      %p227 = scmp.eq.s32.totalorder %s29, 1
      %p228 = por %p226, %p227
      %p229 = scmp.ne.s32.totalorder %s218, %s219
      %p230 = scmp.eq.s32.totalorder %s29, 0
      %p231 = por %p229, %p230
      %p232 = scmp.ne.s32.totalorder %s218, %s219
      %p233 = scmp.eq.s32.totalorder %s30, 1
      %p234 = por %p232, %p233
      %p236 = scmp.ne.s32.totalorder %s219, %s235
      %p237 = scmp.eq.s32.totalorder %s30, 0
      %p238 = por %p236, %p237
      %p239 = scmp.le.s32.totalorder 1, %s24
      %p240 = scmp.lt.s32.totalorder %s24, 3
      %p241 = pnand %p239, %p240
      %p242 = pneg %p241
      // Predicated region
      $region9: #{tpu_custom_call.1} parent=5 // pred_check
        _
      $region10: #{tpu_custom_call.1} parent=5 // pred_check_branch
        %244 = sbr.rel (%p241) target = $region12
      $region11: #{tpu_custom_call.1} parent=5 // pred_region
        %s245 = ssub.s32 %s24, 1
        // Predicated region
        $region13: #{tpu_custom_call.1} parent=11 // pred_check
          %p246 = pneg %p109
        $region14: #{tpu_custom_call.1} parent=11 // pred_check_branch
          %248 = sbr.rel (%p246) target = $region16
        $region15: #{tpu_custom_call.1} parent=11 // pred_region
          %s250 = ssub.s32 2048, 2048
          %251 = vsyncadd [#allocation7], %s250
          %s252 = sshll.u32 [#allocation8], 4
          %s253 = int_to_ptr.vmem [resolvable:$true] %s252
          %258 = dma.hbm_to_vmem [thread:$0]  %s2, 2048, %s253, [#allocation7], 256, 256, 16
        $region16: #{tpu_custom_call.1} parent=11 // pred_fallthru
          _
        // Predicated region
        $region17: #{tpu_custom_call.1} parent=11 // pred_check
          %p259 = pneg %p130
        $region18: #{tpu_custom_call.1} parent=11 // pred_check_branch
          %261 = sbr.rel (%p259) target = $region20
        $region19: #{tpu_custom_call.1} parent=11 // pred_region
          _
        $region20: #{tpu_custom_call.1} parent=11 // pred_fallthru
          _
        // Predicated region
        $region21: #{tpu_custom_call.1} parent=11 // pred_check
          %p262 = pneg %p151
        $region22: #{tpu_custom_call.1} parent=11 // pred_check_branch
          %264 = sbr.rel (%p262) target = $region24
        $region23: #{tpu_custom_call.1} parent=11 // pred_region
          %s266 = ssub.s32 1024, 1024
          %267 = vsyncadd [#allocation10], %s266
          %s268 = sshll.u32 [#allocation9], 4
          %s269 = int_to_ptr.vmem [resolvable:$true] %s268
          %274 = dma.hbm_to_vmem [thread:$0]  %s4, 1024, %s269, [#allocation10], 64, 64, 4
        $region24: #{tpu_custom_call.1} parent=11 // pred_fallthru
          _
        // Predicated region
        $region25: #{tpu_custom_call.1} parent=11 // pred_check
          %p275 = pneg %p177
        $region26: #{tpu_custom_call.1} parent=11 // pred_check_branch
          %277 = sbr.rel (%p275) target = $region28
        $region27: #{tpu_custom_call.1} parent=11 // pred_region
          %s278 = smul.u32 4, %s34
          %s280 = ssub.s32 4096, 4096
          %281 = vsyncadd [#allocation10], %s280
          %s282 = smul.addr %s278, 64
          %s283 = scalar_lea.hbm %s5, %s282
          %s284 = sshll.u32 [#allocation11], 4
          %s285 = int_to_ptr.vmem [resolvable:$true] %s284
          %290 = dma.hbm_to_vmem [thread:$0]  %s283, 4096, %s285, [#allocation10], 256, 256, 16
        $region28: #{tpu_custom_call.1} parent=11 // pred_fallthru
          _
      $region12: #{tpu_custom_call.1} parent=5 // pred_fallthru
        _
      %p291 = scmp.lt.s32.totalorder %s24, 2
      // Predicated region
      $region29: #{tpu_custom_call.1} parent=5 // pred_check
        %p292 = pneg %p291
      $region30: #{tpu_custom_call.1} parent=5 // pred_check_branch
        %294 = sbr.rel (%p292) target = $region32
      $region31: #{tpu_custom_call.1} parent=5 // pred_region
        // Predicated region
        $region33: #{tpu_custom_call.1} parent=31 // pred_check
          %p295 = pneg %p56
        $region34: #{tpu_custom_call.1} parent=31 // pred_check_branch
          %297 = sbr.rel (%p295) target = $region36
        $region35: #{tpu_custom_call.1} parent=31 // pred_region
          %s298 = sand.u32 %s46, 1
          %s299 = scalar_lea.sflag [#allocation4], %s298
          %s300 = sand.u32 %s46, 1
          %s301 = smul.addr %s300, 4
          %s302 = scalar_lea.vmem [#allocation3], %s301
          %s304 = ssub.s32 64, 64
          %305 = vsyncadd %s299, %s304
          %s306 = smul.addr %s31, 64
          %s307 = scalar_lea.hbm %s0, %s306
          %s309 = sshll.u32 %s302, 4
          %s310 = int_to_ptr.vmem [resolvable:$true] %s309
          %312 = dma.hbm_to_vmem [thread:$0]  %s307, 64, %s310, %s299
        $region36: #{tpu_custom_call.1} parent=31 // pred_fallthru
          _
        // Predicated region
        $region37: #{tpu_custom_call.1} parent=31 // pred_check
          %p313 = pneg %p82
        $region38: #{tpu_custom_call.1} parent=31 // pred_check_branch
          %315 = sbr.rel (%p313) target = $region40
        $region39: #{tpu_custom_call.1} parent=31 // pred_region
          %s316 = sand.u32 %s24, 1
          %s317 = scalar_lea.sflag [#allocation7], %s316
          %s318 = sand.u32 %s72, 1
          %s319 = scalar_lea.vmem [#allocation6], %s318
          %s321 = ssub.s32 16, 16
          %322 = vsyncadd %s317, %s321
          %s323 = smul.addr %s31, 16
          %s324 = scalar_lea.hbm %s1, %s323
          %s326 = sshll.u32 %s319, 4
          %s327 = int_to_ptr.vmem [resolvable:$true] %s326
          %329 = dma.hbm_to_vmem [thread:$0]  %s324, 16, %s327, %s317
        $region40: #{tpu_custom_call.1} parent=31 // pred_fallthru
          _
      $region32: #{tpu_custom_call.1} parent=5 // pred_fallthru
        _
      %p330 = scmp.le.s32.totalorder 1, %s24
      %p331 = scmp.lt.s32.totalorder %s24, 3
      %p332 = pnand %p330, %p331
      %p333 = pneg %p332
      // Predicated region
      $region41: #{tpu_custom_call.1} parent=5 // pred_check
        _
      $region42: #{tpu_custom_call.1} parent=5 // pred_check_branch
        %335 = sbr.rel (%p332) target = $region44
      $region43: #{tpu_custom_call.1} parent=5 // pred_region
        %s336 = ssub.s32 %s24, 1
        %s337 = sand.u32 %s49, 1
        %s338 = scalar_lea.sflag [#allocation4], %s337
        %s339 = sand.u32 %s49, 1
        %s340 = smul.addr %s339, 4
        %s341 = scalar_lea.vmem [#allocation3], %s340
        // Predicated region
        $region45: #{tpu_custom_call.1} parent=43 // pred_check
          %p342 = pneg %p62
        $region46: #{tpu_custom_call.1} parent=43 // pred_check_branch
          %344 = sbr.rel (%p342) target = $region48
        $region47: #{tpu_custom_call.1} parent=43 // pred_region
          %345 = dma.done %s338, 64
        $region48: #{tpu_custom_call.1} parent=43 // pred_fallthru
          _
        %s346 = sand.u32 %s29, 1
        %s347 = scalar_lea.sflag [#allocation7], %s346
        %s348 = sand.u32 %s75, 1
        %s349 = scalar_lea.vmem [#allocation6], %s348
        // Predicated region
        $region49: #{tpu_custom_call.1} parent=43 // pred_check
          %p350 = pneg %p88
        $region50: #{tpu_custom_call.1} parent=43 // pred_check_branch
          %352 = sbr.rel (%p350) target = $region52
        $region51: #{tpu_custom_call.1} parent=43 // pred_region
          %353 = dma.done %s347, 16
        $region52: #{tpu_custom_call.1} parent=43 // pred_fallthru
          _
        // Predicated region
        $region53: #{tpu_custom_call.1} parent=43 // pred_check
          %p354 = pneg %p109
        $region54: #{tpu_custom_call.1} parent=43 // pred_check_branch
          %356 = sbr.rel (%p354) target = $region56
        $region55: #{tpu_custom_call.1} parent=43 // pred_region
          %357 = dma.done [#allocation7], 2048
        $region56: #{tpu_custom_call.1} parent=43 // pred_fallthru
          _
        // Predicated region
        $region57: #{tpu_custom_call.1} parent=43 // pred_check
          %p358 = pneg %p151
        $region58: #{tpu_custom_call.1} parent=43 // pred_check_branch
          %360 = sbr.rel (%p358) target = $region60
        $region59: #{tpu_custom_call.1} parent=43 // pred_region
          %361 = dma.done [#allocation10], 1024
        $region60: #{tpu_custom_call.1} parent=43 // pred_fallthru
          _
        // Predicated region
        $region61: #{tpu_custom_call.1} parent=43 // pred_check
          %p362 = pneg %p177
        $region62: #{tpu_custom_call.1} parent=43 // pred_check_branch
          %364 = sbr.rel (%p362) target = $region64
        $region63: #{tpu_custom_call.1} parent=43 // pred_region
          %365 = dma.done [#allocation10], 4096
        $region64: #{tpu_custom_call.1} parent=43 // pred_fallthru
          _
        %s366 = sand.u32 %s49, 1
        %s367 = scalar_lea.sflag [#allocation4], %s366
        %s368 = sand.u32 %s49, 1
        %s369 = smul.addr %s368, 4
        %s370 = scalar_lea.vmem [#allocation3], %s369
        %p371 = pneg %p62
        %p372 = pneg %p59
        %s373 = sand.u32 %s29, 1
        %s374 = scalar_lea.sflag [#allocation7], %s373
        %s375 = sand.u32 %s75, 1
        %s376 = scalar_lea.vmem [#allocation6], %s375
        %p377 = pneg %p88
        %p378 = pneg %p85
        %p379 = pneg %p109
        %p380 = pneg %p106
        %p381 = pneg %p130
        %p382 = pneg %p127
        %p383 = pneg %p151
        %p384 = pneg %p148
        %p385 = pneg %p177
        %p386 = pneg %p174
        %p387 = pneg %p203
        %p388 = pneg %p200
        %s389 = sand.u32 %s190, 1
        %s390 = scalar_lea.sflag [#allocation5], %s389
        %s391 = sand.u32 %s190, 1
        %s392 = smul.addr %s391, 8
        %s393 = scalar_lea.vmem [#allocation12], %s392
        %p394 = pneg %p231
        %p395 = pneg %p228
        %s396 = smul.u32 4, %s34
        %p397 = scmp.lt.s32.totalorder %s33, 1
        %s398 = scalar_select %p397, %s33, 1
        %p399 = scmp.lt.s32.totalorder %s396, 3
        %s400 = scalar_select %p399, %s396, 3
        %s401 = smul.addr %s398, 4
        %s402 = sadd.s32 %s400, %s401
        %s403 = smul.addr %s402, 4
        %s404 = scalar_lea.vmem %s7, %s403
        %s405 = smul.u32 4, %s34
        %s406 = smul.u32 4, %s34
        %p407 = scmp.lt.s32.totalorder %s33, 1
        %s408 = scalar_select %p407, %s33, 1
        %p409 = scmp.lt.s32.totalorder %s406, 3
        %s410 = scalar_select %p409, %s406, 3
        %s411 = smul.addr %s408, 4
        %s412 = sadd.s32 %s410, %s411
        %s413 = smul.addr %s412, 4
        %s414 = scalar_lea.vmem %s7, %s413
        %s415 = smul.u32 4, %s34
        %p417 = scmp.eq.s32.totalorder %s34, 0
        // Predicated region
        $region65: #{tpu_custom_call.1} parent=43 // pred_check
          %p418 = pneg %p417
        $region66: #{tpu_custom_call.1} parent=43 // pred_check_branch
          %420 = sbr.rel (%p418) target = $region68
        $region67: #{tpu_custom_call.1} parent=43 // pred_region
          %v421 = vld [vmem:[%s341] sm:$0xf]
          %v422 = vld [vmem:[#allocation8] sm:$0xff]
          %v423 = vld [vmem:[#allocation8 + $0x8] sm:$0xff]
          %v424 = vld [vmem:[#allocation8 + $0x10] sm:$0xff]
          %v425 = vld [vmem:[#allocation8 + $0x18] sm:$0xff]
          %v426 = vld [vmem:[#allocation8 + $0x20] sm:$0xff]
          %v427 = vld [vmem:[#allocation8 + $0x28] sm:$0xff]
          %v428 = vld [vmem:[#allocation8 + $0x30] sm:$0xff]
          %v429 = vld [vmem:[#allocation8 + $0x38] sm:$0xff]
          %v430 = vld [vmem:[#allocation8 + $0x40] sm:$0xff]
          %v431 = vld [vmem:[#allocation8 + $0x48] sm:$0xff]
          %v432 = vld [vmem:[#allocation8 + $0x50] sm:$0xff]
          %v433 = vld [vmem:[#allocation8 + $0x58] sm:$0xff]
          %v434 = vld [vmem:[#allocation8 + $0x60] sm:$0xff]
          %v435 = vld [vmem:[#allocation8 + $0x68] sm:$0xff]
          %v436 = vld [vmem:[#allocation8 + $0x70] sm:$0xff]
          %v437 = vld [vmem:[#allocation8 + $0x78] sm:$0xff]
          %v438 = vld [vmem:[%s3] sm:$0xf]
          %v440 = vlaneseq
          %v441 = vshrl.u32 %v440, 7
          %v442 = vsub.s32 0, %v441
          %v443 = vrot.slane %v438, %v442
          %v444 = vlaneseq
          %v445 = vshrl.u32 %v444, 7
          %v446 = vsub.s32 1, %v445
          %v447 = vrot.slane %v438, %v446
          %v448 = vlaneseq
          %v449 = vshrl.u32 %v448, 7
          %v450 = vsub.s32 2, %v449
          %v451 = vrot.slane %v438, %v450
          %v452 = vlaneseq
          %v453 = vshrl.u32 %v452, 7
          %v454 = vsub.s32 3, %v453
          %v455 = vrot.slane %v438, %v454
          %v476 = vunpack.c.l.b16 %v422
          %v477 = vunpack.c.h.b16 %v422
          %v478 = vunpack.c.l.b16 %v423
          %v479 = vunpack.c.h.b16 %v423
          %v480 = vunpack.c.l.b16 %v424
          %v481 = vunpack.c.h.b16 %v424
          %v482 = vunpack.c.l.b16 %v425
          %v483 = vunpack.c.h.b16 %v425
          %v484 = vunpack.c.l.b16 %v426
          %v485 = vunpack.c.h.b16 %v426
          %v486 = vunpack.c.l.b16 %v427
          %v487 = vunpack.c.h.b16 %v427
          %v488 = vunpack.c.l.b16 %v428
          %v489 = vunpack.c.h.b16 %v428
          %v490 = vunpack.c.l.b16 %v429
          %v491 = vunpack.c.h.b16 %v429
          %v492 = vunpack.c.l.b16 %v430
          %v493 = vunpack.c.h.b16 %v430
          %v494 = vunpack.c.l.b16 %v431
          %v495 = vunpack.c.h.b16 %v431
          %v496 = vunpack.c.l.b16 %v432
          %v497 = vunpack.c.h.b16 %v432
          %v498 = vunpack.c.l.b16 %v433
          %v499 = vunpack.c.h.b16 %v433
          %v500 = vunpack.c.l.b16 %v434
          %v501 = vunpack.c.h.b16 %v434
          %v502 = vunpack.c.l.b16 %v435
          %v503 = vunpack.c.h.b16 %v435
          %v504 = vunpack.c.l.b16 %v436
          %v505 = vunpack.c.h.b16 %v436
          %v506 = vunpack.c.l.b16 %v437
          %v507 = vunpack.c.h.b16 %v437
          %v508 = vpack.c.b16 %v480, %v476
          %v509 = vpack.c.b16 %v481, %v477
          %v510 = vpack.c.b16 %v482, %v478
          %v511 = vpack.c.b16 %v483, %v479
          %v512 = vpack.c.b16 %v488, %v484
          %v513 = vpack.c.b16 %v489, %v485
          %v514 = vpack.c.b16 %v490, %v486
          %v515 = vpack.c.b16 %v491, %v487
          %v516 = vpack.c.b16 %v496, %v492
          %v517 = vpack.c.b16 %v497, %v493
          %v518 = vpack.c.b16 %v498, %v494
          %v519 = vpack.c.b16 %v499, %v495
          %v520 = vpack.c.b16 %v504, %v500
          %v521 = vpack.c.b16 %v505, %v501
          %v522 = vpack.c.b16 %v506, %v502
          %v523 = vpack.c.b16 %v507, %v503
          %vm540 = vcmask 523264
          %v542 = vsel %vm540, %v421, 0
          %544 = vmatprep.subr.bf16.mxu0 0
          %545 = vmatpush1.bf16.msra.mxu0 0
          %546 = vmatprep.subr.bf16.mxu0 0
          %547 = vmatpush1.bf16.msra.mxu0 0
          %548 = vmatprep.subr.bf16.mxu0 0
          %549 = vmatpush1.bf16.msra.mxu0 0
          %550 = vmatprep.subr.bf16.mxu0 0
          %551 = vmatpush1.bf16.msra.mxu0 0
          %552 = vmatprep.subr.bf16.mxu0 %v521
          %553 = vmatpush1.bf16.msra.mxu0 %v520
          %554 = vmatprep.subr.bf16.mxu0 %v517
          %555 = vmatpush1.bf16.msra.mxu0 %v516
          %556 = vmatprep.subr.bf16.mxu0 %v513
          %557 = vmatpush1.bf16.msra.mxu0 %v512
          %558 = vmatprep.subr.bf16.mxu0 %v509
          %559 = vmatpush1.bf16.msra.mxu0 %v508
          %560 = vmatprep.subr.bf16.mxu0 0
          %561 = vmatpush2.bf16.msra.mxu0 0
          %562 = vmatprep.subr.bf16.mxu0 0
          %563 = vmatpush2.bf16.msra.mxu0 0
          %564 = vmatprep.subr.bf16.mxu0 0
          %565 = vmatpush2.bf16.msra.mxu0 0
          %566 = vmatprep.subr.bf16.mxu0 0
          %567 = vmatpush2.bf16.msra.mxu0 0
          %568 = vmatprep.subr.bf16.mxu0 0
          %569 = vmatpush2.bf16.msra.mxu0 0
          %570 = vmatprep.subr.bf16.mxu0 0
          %571 = vmatpush2.bf16.msra.mxu0 0
          %572 = vmatprep.subr.bf16.mxu0 0
          %573 = vmatpush2.bf16.msra.mxu0 0
          %574 = vmatprep.subr.bf16.mxu0 0
          %575 = vmatpush2.bf16.msra.mxu0 0
          %576 = vmatprep.mubr.bf16.mxu0 0
          %577 = vmatmul.mubr.bf16.gmra.mxu0 %v542
          %v578 = vpop.f32.mrf.mxu0
          %v579 = vadd.f32 %v443, %v578
          %v580 = vpop.f32.mrf.mxu0
          %v581 = vadd.f32 %v447, %v580
          %v582 = vpop.f32.mrf.mxu0
          %v583 = vpop.f32.mrf.mxu0
          %584 = vdwg.mxu0
          %585 = vmatprep.subr.bf16.mxu0 0
          %586 = vmatpush1.bf16.msra.mxu0 0
          %587 = vmatprep.subr.bf16.mxu0 0
          %588 = vmatpush1.bf16.msra.mxu0 0
          %589 = vmatprep.subr.bf16.mxu0 0
          %590 = vmatpush1.bf16.msra.mxu0 0
          %591 = vmatprep.subr.bf16.mxu0 0
          %592 = vmatpush1.bf16.msra.mxu0 0
          %593 = vmatprep.subr.bf16.mxu0 %v523
          %594 = vmatpush1.bf16.msra.mxu0 %v522
          %595 = vmatprep.subr.bf16.mxu0 %v519
          %596 = vmatpush1.bf16.msra.mxu0 %v518
          %597 = vmatprep.subr.bf16.mxu0 %v515
          %598 = vmatpush1.bf16.msra.mxu0 %v514
          %599 = vmatprep.subr.bf16.mxu0 %v511
          %600 = vmatpush1.bf16.msra.mxu0 %v510
          %601 = vmatprep.subr.bf16.mxu0 0
          %602 = vmatpush2.bf16.msra.mxu0 0
          %603 = vmatprep.subr.bf16.mxu0 0
          %604 = vmatpush2.bf16.msra.mxu0 0
          %605 = vmatprep.subr.bf16.mxu0 0
          %606 = vmatpush2.bf16.msra.mxu0 0
          %607 = vmatprep.subr.bf16.mxu0 0
          %608 = vmatpush2.bf16.msra.mxu0 0
          %609 = vmatprep.subr.bf16.mxu0 0
          %610 = vmatpush2.bf16.msra.mxu0 0
          %611 = vmatprep.subr.bf16.mxu0 0
          %612 = vmatpush2.bf16.msra.mxu0 0
          %613 = vmatprep.subr.bf16.mxu0 0
          %614 = vmatpush2.bf16.msra.mxu0 0
          %615 = vmatprep.subr.bf16.mxu0 0
          %616 = vmatpush2.bf16.msra.mxu0 0
          %617 = vmatprep.mubr.bf16.mxu0 0
          %618 = vmatmul.mubr.bf16.gmra.mxu0 %v542
          %v619 = vpop.f32.mrf.mxu0
          %v620 = vadd.f32 %v451, %v619
          %v621 = vpop.f32.mrf.mxu0
          %v622 = vadd.f32 %v455, %v621
          %v623 = vpop.f32.mrf.mxu0
          %v624 = vpop.f32.mrf.mxu0
          %625 = vdwg.mxu0
          %vm626 = vcmp.ge.f32.partialorder %v579, 0.0
          %vm627 = vcmp.ge.f32.partialorder %v581, 0.0
          %vm628 = vcmp.ge.f32.partialorder %v620, 0.0
          %vm629 = vcmp.ge.f32.partialorder %v622, 0.0
          %v630 = vmul.f32 %v579, 0.1
          %v631 = vmul.f32 %v581, 0.1
          %v632 = vmul.f32 %v620, 0.1
          %v633 = vmul.f32 %v622, 0.1
          %v634 = vsel %vm626, %v579, %v630
          %v635 = vsel %vm627, %v581, %v631
          %v636 = vsel %vm628, %v620, %v632
          %v637 = vsel %vm629, %v622, %v633
          %v638 = vpack.c.bf16 %v634, %v634
          %v639 = vpack.c.bf16 %v635, %v635
          %v640 = vpack.c.bf16 %v636, %v636
          %v641 = vpack.c.bf16 %v637, %v637
          %v646 = vunpack.c.l.b16 %v638
          %v647 = vunpack.c.l.b16 %v639
          %v648 = vunpack.c.l.b16 %v640
          %v649 = vunpack.c.l.b16 %v641
          %v650 = vpack.c.b16 %v647, %v646
          %v651 = vpack.c.b16 %v649, %v648
          %654 = vst [vmem:[#allocation2] sm:$0xff] %v650
          %655 = vst [vmem:[#allocation2 + $0x8] sm:$0xff] %v651
          %v656 = vld [vmem:[#allocation9] sm:$0xf]
          %v657 = vld [vmem:[#allocation9 + $0x4] sm:$0xf]
          %v658 = vld [vmem:[#allocation9 + $0x8] sm:$0xf]
          %v659 = vld [vmem:[#allocation9 + $0xc] sm:$0xf]
          %v660 = vld [vmem:[#allocation9 + $0x10] sm:$0xf]
          %v661 = vld [vmem:[#allocation9 + $0x14] sm:$0xf]
          %v662 = vld [vmem:[#allocation9 + $0x18] sm:$0xf]
          %v663 = vld [vmem:[#allocation9 + $0x1c] sm:$0xf]
          %v664 = vld [vmem:[#allocation9 + $0x20] sm:$0xf]
          %v665 = vld [vmem:[#allocation9 + $0x24] sm:$0xf]
          %v666 = vld [vmem:[#allocation9 + $0x28] sm:$0xf]
          %v667 = vld [vmem:[#allocation9 + $0x2c] sm:$0xf]
          %v668 = vld [vmem:[#allocation9 + $0x30] sm:$0xf]
          %v669 = vld [vmem:[#allocation9 + $0x34] sm:$0xf]
          %v670 = vld [vmem:[#allocation9 + $0x38] sm:$0xf]
          %v671 = vld [vmem:[#allocation9 + $0x3c] sm:$0xf]
          %v688 = vunpack.c.l.b16 %v656
          %v689 = vunpack.c.l.b16 %v657
          %v690 = vunpack.c.l.b16 %v658
          %v691 = vunpack.c.l.b16 %v659
          %v692 = vunpack.c.l.b16 %v660
          %v693 = vunpack.c.l.b16 %v661
          %v694 = vunpack.c.l.b16 %v662
          %v695 = vunpack.c.l.b16 %v663
          %v696 = vunpack.c.l.b16 %v664
          %v697 = vunpack.c.l.b16 %v665
          %v698 = vunpack.c.l.b16 %v666
          %v699 = vunpack.c.l.b16 %v667
          %v700 = vunpack.c.l.b16 %v668
          %v701 = vunpack.c.l.b16 %v669
          %v702 = vunpack.c.l.b16 %v670
          %v703 = vunpack.c.l.b16 %v671
          %v704 = vpack.c.b16 %v689, %v688
          %v705 = vpack.c.b16 %v691, %v690
          %v706 = vpack.c.b16 %v693, %v692
          %v707 = vpack.c.b16 %v695, %v694
          %v708 = vpack.c.b16 %v697, %v696
          %v709 = vpack.c.b16 %v699, %v698
          %v710 = vpack.c.b16 %v701, %v700
          %v711 = vpack.c.b16 %v703, %v702
          %720 = vmatprep.subr.bf16.mxu0 0
          %721 = vmatpush1.bf16.msra.mxu0 %v711
          %722 = vmatprep.subr.bf16.mxu0 0
          %723 = vmatpush1.bf16.msra.mxu0 %v710
          %724 = vmatprep.subr.bf16.mxu0 0
          %725 = vmatpush1.bf16.msra.mxu0 %v709
          %726 = vmatprep.subr.bf16.mxu0 0
          %727 = vmatpush1.bf16.msra.mxu0 %v708
          %728 = vmatprep.subr.bf16.mxu0 0
          %729 = vmatpush1.bf16.msra.mxu0 %v707
          %730 = vmatprep.subr.bf16.mxu0 0
          %731 = vmatpush1.bf16.msra.mxu0 %v706
          %732 = vmatprep.subr.bf16.mxu0 0
          %733 = vmatpush1.bf16.msra.mxu0 %v705
          %734 = vmatprep.subr.bf16.mxu0 0
          %735 = vmatpush1.bf16.msra.mxu0 %v704
          %736 = vmatprep.subr.bf16.mxu0 0
          %737 = vmatpush2.bf16.msra.mxu0 0
          %738 = vmatprep.subr.bf16.mxu0 0
          %739 = vmatpush2.bf16.msra.mxu0 0
          %740 = vmatprep.subr.bf16.mxu0 0
          %741 = vmatpush2.bf16.msra.mxu0 0
          %742 = vmatprep.subr.bf16.mxu0 0
          %743 = vmatpush2.bf16.msra.mxu0 0
          %744 = vmatprep.subr.bf16.mxu0 0
          %745 = vmatpush2.bf16.msra.mxu0 0
          %746 = vmatprep.subr.bf16.mxu0 0
          %747 = vmatpush2.bf16.msra.mxu0 0
          %748 = vmatprep.subr.bf16.mxu0 0
          %749 = vmatpush2.bf16.msra.mxu0 0
          %750 = vmatprep.subr.bf16.mxu0 0
          %751 = vmatpush2.bf16.msra.mxu0 0
          %752 = vmatprep.mubr.bf16.mxu0 0
          %753 = vmatmul.mubr.bf16.gmra.mxu0 %v639
          %v754 = vpop.f32.mrf.mxu0
          %v755 = vadd.f32 0.0, %v754
          %v756 = vpop.f32.mrf.mxu0
          %v757 = vpop.f32.mrf.mxu0
          %v758 = vpop.f32.mrf.mxu0
          %759 = vdwg.mxu0
          %v760 = vpack.c.bf16 %v755, %v755
          %761 = vmatprep.subr.bf16.mxu0 0
          %762 = vmatpush1.bf16.xpose.msra.mxu0 0
          %763 = vmatprep.subr.bf16.mxu0 0
          %764 = vmatpush1.bf16.xpose.msra.mxu0 0
          %765 = vmatprep.subr.bf16.mxu0 0
          %766 = vmatpush1.bf16.xpose.msra.mxu0 0
          %767 = vmatprep.subr.bf16.mxu0 0
          %768 = vmatpush1.bf16.xpose.msra.mxu0 0
          %769 = vmatprep.subr.bf16.mxu0 0
          %770 = vmatpush1.bf16.xpose.msra.mxu0 0
          %771 = vmatprep.subr.bf16.mxu0 0
          %772 = vmatpush1.bf16.xpose.msra.mxu0 0
          %773 = vmatprep.subr.bf16.mxu0 0
          %774 = vmatpush1.bf16.xpose.msra.mxu0 0
          %775 = vmatprep.subr.bf16.mxu0 0
          %776 = vmatpush1.bf16.xpose.msra.mxu0 %v638
          %777 = vmatprep.subr.bf16.mxu0 0
          %778 = vmatpush2.bf16.xpose.msra.mxu0 0
          %779 = vmatprep.subr.bf16.mxu0 0
          %780 = vmatpush2.bf16.xpose.msra.mxu0 0
          %781 = vmatprep.subr.bf16.mxu0 0
          %782 = vmatpush2.bf16.xpose.msra.mxu0 0
          %783 = vmatprep.subr.bf16.mxu0 0
          %784 = vmatpush2.bf16.xpose.msra.mxu0 0
          %785 = vmatprep.subr.bf16.mxu0 0
          %786 = vmatpush2.bf16.xpose.msra.mxu0 0
          %787 = vmatprep.subr.bf16.mxu0 0
          %788 = vmatpush2.bf16.xpose.msra.mxu0 0
          %789 = vmatprep.subr.bf16.mxu0 0
          %790 = vmatpush2.bf16.xpose.msra.mxu0 0
          %791 = vmatprep.subr.bf16.mxu0 0
          %792 = vmatpush2.bf16.xpose.msra.mxu0 0
          %793 = vmatprep.mubr.bf16.mxu0 0
          %794 = vmatmul.mubr.bf16.gmra.mxu0 %v760
          %v795 = vpop.f32.mrf.mxu0
          %v796 = vadd.f32 0.0, %v795
          %v797 = vpop.f32.mrf.mxu0
          %v798 = vpop.f32.mrf.mxu0
          %v799 = vpop.f32.mrf.mxu0
          %800 = vdwg.mxu0
          %v801 = vld [vmem:[%s349] sm:$0x1]
          %vm802 = vcmp.gt.s32.totalorder %v801, 0
          %v803 = vsel %vm802, 1, 0
          %v804 = vlaneseq
          %v805 = vshrl.u32 %v804, 7
          %v806 = vsub.s32 0, %v805
          %v807 = vrot.slane %v803, %v806
          %vm808 = vcmp.eq.s32.totalorder %v807, 1
          %v809 = vsel %vm808, %v796, -inf
          %vm810 = vcmask 64512
          %811 = vst.msk [vmem:[%s393] sm:$0xff] %vm810, %v809
        $region68: #{tpu_custom_call.1} parent=43 // pred_fallthru
          _
        %v812 = vld [vmem:[#allocation2 + $0x8] sm:$0xf]
        %v813 = vld [vmem:[#allocation2 + $0xc] sm:$0xf]
        %v814 = vld [vmem:[#allocation11] sm:$0xff]
        %v815 = vld [vmem:[#allocation11 + $0x8] sm:$0xff]
        %v816 = vld [vmem:[#allocation11 + $0x10] sm:$0xff]
        %v817 = vld [vmem:[#allocation11 + $0x18] sm:$0xff]
        %v818 = vld [vmem:[#allocation11 + $0x20] sm:$0xff]
        %v819 = vld [vmem:[#allocation11 + $0x28] sm:$0xff]
        %v820 = vld [vmem:[#allocation11 + $0x30] sm:$0xff]
        %v821 = vld [vmem:[#allocation11 + $0x38] sm:$0xff]
        %v822 = vld [vmem:[#allocation11 + $0x40] sm:$0xff]
        %v823 = vld [vmem:[#allocation11 + $0x48] sm:$0xff]
        %v824 = vld [vmem:[#allocation11 + $0x50] sm:$0xff]
        %v825 = vld [vmem:[#allocation11 + $0x58] sm:$0xff]
        %v826 = vld [vmem:[#allocation11 + $0x60] sm:$0xff]
        %v827 = vld [vmem:[#allocation11 + $0x68] sm:$0xff]
        %v828 = vld [vmem:[#allocation11 + $0x70] sm:$0xff]
        %v829 = vld [vmem:[#allocation11 + $0x78] sm:$0xff]
        %v830 = vld [vmem:[#allocation11 + $0x80] sm:$0xff]
        %v831 = vld [vmem:[#allocation11 + $0x88] sm:$0xff]
        %v832 = vld [vmem:[#allocation11 + $0x90] sm:$0xff]
        %v833 = vld [vmem:[#allocation11 + $0x98] sm:$0xff]
        %v834 = vld [vmem:[#allocation11 + $0xa0] sm:$0xff]
        %v835 = vld [vmem:[#allocation11 + $0xa8] sm:$0xff]
        %v836 = vld [vmem:[#allocation11 + $0xb0] sm:$0xff]
        %v837 = vld [vmem:[#allocation11 + $0xb8] sm:$0xff]
        %v838 = vld [vmem:[#allocation11 + $0xc0] sm:$0xff]
        %v839 = vld [vmem:[#allocation11 + $0xc8] sm:$0xff]
        %v840 = vld [vmem:[#allocation11 + $0xd0] sm:$0xff]
        %v841 = vld [vmem:[#allocation11 + $0xd8] sm:$0xff]
        %v842 = vld [vmem:[#allocation11 + $0xe0] sm:$0xff]
        %v843 = vld [vmem:[#allocation11 + $0xe8] sm:$0xff]
        %v844 = vld [vmem:[#allocation11 + $0xf0] sm:$0xff]
        %v845 = vld [vmem:[#allocation11 + $0xf8] sm:$0xff]
        %v878 = vunpack.c.l.b16 %v814
        %v879 = vunpack.c.h.b16 %v814
        %v880 = vunpack.c.l.b16 %v815
        %v881 = vunpack.c.h.b16 %v815
        %v882 = vunpack.c.l.b16 %v816
        %v883 = vunpack.c.h.b16 %v816
        %v884 = vunpack.c.l.b16 %v817
        %v885 = vunpack.c.h.b16 %v817
        %v886 = vunpack.c.l.b16 %v818
        %v887 = vunpack.c.h.b16 %v818
        %v888 = vunpack.c.l.b16 %v819
        %v889 = vunpack.c.h.b16 %v819
        %v890 = vunpack.c.l.b16 %v820
        %v891 = vunpack.c.h.b16 %v820
        %v892 = vunpack.c.l.b16 %v821
        %v893 = vunpack.c.h.b16 %v821
        %v894 = vunpack.c.l.b16 %v822
        %v895 = vunpack.c.h.b16 %v822
        %v896 = vunpack.c.l.b16 %v823
        %v897 = vunpack.c.h.b16 %v823
        %v898 = vunpack.c.l.b16 %v824
        %v899 = vunpack.c.h.b16 %v824
        %v900 = vunpack.c.l.b16 %v825
        %v901 = vunpack.c.h.b16 %v825
        %v902 = vunpack.c.l.b16 %v826
        %v903 = vunpack.c.h.b16 %v826
        %v904 = vunpack.c.l.b16 %v827
        %v905 = vunpack.c.h.b16 %v827
        %v906 = vunpack.c.l.b16 %v828
        %v907 = vunpack.c.h.b16 %v828
        %v908 = vunpack.c.l.b16 %v829
        %v909 = vunpack.c.h.b16 %v829
        %v910 = vunpack.c.l.b16 %v830
        %v911 = vunpack.c.h.b16 %v830
        %v912 = vunpack.c.l.b16 %v831
        %v913 = vunpack.c.h.b16 %v831
        %v914 = vunpack.c.l.b16 %v832
        %v915 = vunpack.c.h.b16 %v832
        %v916 = vunpack.c.l.b16 %v833
        %v917 = vunpack.c.h.b16 %v833
        %v918 = vunpack.c.l.b16 %v834
        %v919 = vunpack.c.h.b16 %v834
        %v920 = vunpack.c.l.b16 %v835
        %v921 = vunpack.c.h.b16 %v835
        %v922 = vunpack.c.l.b16 %v836
        %v923 = vunpack.c.h.b16 %v836
        %v924 = vunpack.c.l.b16 %v837
        %v925 = vunpack.c.h.b16 %v837
        %v926 = vunpack.c.l.b16 %v838
        %v927 = vunpack.c.h.b16 %v838
        %v928 = vunpack.c.l.b16 %v839
        %v929 = vunpack.c.h.b16 %v839
        %v930 = vunpack.c.l.b16 %v840
        %v931 = vunpack.c.h.b16 %v840
        %v932 = vunpack.c.l.b16 %v841
        %v933 = vunpack.c.h.b16 %v841
        %v934 = vunpack.c.l.b16 %v842
        %v935 = vunpack.c.h.b16 %v842
        %v936 = vunpack.c.l.b16 %v843
        %v937 = vunpack.c.h.b16 %v843
        %v938 = vunpack.c.l.b16 %v844
        %v939 = vunpack.c.h.b16 %v844
        %v940 = vunpack.c.l.b16 %v845
        %v941 = vunpack.c.h.b16 %v845
        %v942 = vpack.c.b16 %v882, %v878
        %v943 = vpack.c.b16 %v883, %v879
        %v944 = vpack.c.b16 %v884, %v880
        %v945 = vpack.c.b16 %v885, %v881
        %v946 = vpack.c.b16 %v890, %v886
        %v947 = vpack.c.b16 %v891, %v887
        %v948 = vpack.c.b16 %v892, %v888
        %v949 = vpack.c.b16 %v893, %v889
        %v950 = vpack.c.b16 %v898, %v894
        %v951 = vpack.c.b16 %v899, %v895
        %v952 = vpack.c.b16 %v900, %v896
        %v953 = vpack.c.b16 %v901, %v897
        %v954 = vpack.c.b16 %v906, %v902
        %v955 = vpack.c.b16 %v907, %v903
        %v956 = vpack.c.b16 %v908, %v904
        %v957 = vpack.c.b16 %v909, %v905
        %v958 = vpack.c.b16 %v914, %v910
        %v959 = vpack.c.b16 %v915, %v911
        %v960 = vpack.c.b16 %v916, %v912
        %v961 = vpack.c.b16 %v917, %v913
        %v962 = vpack.c.b16 %v922, %v918
        %v963 = vpack.c.b16 %v923, %v919
        %v964 = vpack.c.b16 %v924, %v920
        %v965 = vpack.c.b16 %v925, %v921
        %v966 = vpack.c.b16 %v930, %v926
        %v967 = vpack.c.b16 %v931, %v927
        %v968 = vpack.c.b16 %v932, %v928
        %v969 = vpack.c.b16 %v933, %v929
        %v970 = vpack.c.b16 %v938, %v934
        %v971 = vpack.c.b16 %v939, %v935
        %v972 = vpack.c.b16 %v940, %v936
        %v973 = vpack.c.b16 %v941, %v937
        %1006 = vmatprep.subr.bf16.mxu0 %v971
        %1007 = vmatpush1.bf16.msra.mxu0 %v970
        %1008 = vmatprep.subr.bf16.mxu0 %v967
        %1009 = vmatpush1.bf16.msra.mxu0 %v966
        %1010 = vmatprep.subr.bf16.mxu0 %v963
        %1011 = vmatpush1.bf16.msra.mxu0 %v962
        %1012 = vmatprep.subr.bf16.mxu0 %v959
        %1013 = vmatpush1.bf16.msra.mxu0 %v958
        %1014 = vmatprep.subr.bf16.mxu0 %v955
        %1015 = vmatpush1.bf16.msra.mxu0 %v954
        %1016 = vmatprep.subr.bf16.mxu0 %v951
        %1017 = vmatpush1.bf16.msra.mxu0 %v950
        %1018 = vmatprep.subr.bf16.mxu0 %v947
        %1019 = vmatpush1.bf16.msra.mxu0 %v946
        %1020 = vmatprep.subr.bf16.mxu0 %v943
        %1021 = vmatpush1.bf16.msra.mxu0 %v942
        %1022 = vmatprep.subr.bf16.mxu0 0
        %1023 = vmatpush2.bf16.msra.mxu0 0
        %1024 = vmatprep.subr.bf16.mxu0 0
        %1025 = vmatpush2.bf16.msra.mxu0 0
        %1026 = vmatprep.subr.bf16.mxu0 0
        %1027 = vmatpush2.bf16.msra.mxu0 0
        %1028 = vmatprep.subr.bf16.mxu0 0
        %1029 = vmatpush2.bf16.msra.mxu0 0
        %1030 = vmatprep.subr.bf16.mxu0 0
        %1031 = vmatpush2.bf16.msra.mxu0 0
        %1032 = vmatprep.subr.bf16.mxu0 0
        %1033 = vmatpush2.bf16.msra.mxu0 0
        %1034 = vmatprep.subr.bf16.mxu0 0
        %1035 = vmatpush2.bf16.msra.mxu0 0
        %1036 = vmatprep.subr.bf16.mxu0 0
        %1037 = vmatpush2.bf16.msra.mxu0 0
        %1038 = vmatprep.mubr.bf16.mxu0 0
        %1039 = vmatmul.mubr.bf16.gmra.mxu0 %v813
        %v1040 = vpop.f32.mrf.mxu0
        %v1041 = vadd.f32 0.0, %v1040
        %v1042 = vpop.f32.mrf.mxu0
        %v1043 = vadd.f32 0.0, %v1042
        %v1044 = vpop.f32.mrf.mxu0
        %v1045 = vpop.f32.mrf.mxu0
        %1046 = vdwg.mxu0
        %1047 = vmatprep.subr.bf16.mxu0 %v973
        %1048 = vmatpush1.bf16.msra.mxu0 %v972
        %1049 = vmatprep.subr.bf16.mxu0 %v969
        %1050 = vmatpush1.bf16.msra.mxu0 %v968
        %1051 = vmatprep.subr.bf16.mxu0 %v965
        %1052 = vmatpush1.bf16.msra.mxu0 %v964
        %1053 = vmatprep.subr.bf16.mxu0 %v961
        %1054 = vmatpush1.bf16.msra.mxu0 %v960
        %1055 = vmatprep.subr.bf16.mxu0 %v957
        %1056 = vmatpush1.bf16.msra.mxu0 %v956
        %1057 = vmatprep.subr.bf16.mxu0 %v953
        %1058 = vmatpush1.bf16.msra.mxu0 %v952
        %1059 = vmatprep.subr.bf16.mxu0 %v949
        %1060 = vmatpush1.bf16.msra.mxu0 %v948
        %1061 = vmatprep.subr.bf16.mxu0 %v945
        %1062 = vmatpush1.bf16.msra.mxu0 %v944
        %1063 = vmatprep.subr.bf16.mxu0 0
        %1064 = vmatpush2.bf16.msra.mxu0 0
        %1065 = vmatprep.subr.bf16.mxu0 0
        %1066 = vmatpush2.bf16.msra.mxu0 0
        %1067 = vmatprep.subr.bf16.mxu0 0
        %1068 = vmatpush2.bf16.msra.mxu0 0
        %1069 = vmatprep.subr.bf16.mxu0 0
        %1070 = vmatpush2.bf16.msra.mxu0 0
        %1071 = vmatprep.subr.bf16.mxu0 0
        %1072 = vmatpush2.bf16.msra.mxu0 0
        %1073 = vmatprep.subr.bf16.mxu0 0
        %1074 = vmatpush2.bf16.msra.mxu0 0
        %1075 = vmatprep.subr.bf16.mxu0 0
        %1076 = vmatpush2.bf16.msra.mxu0 0
        %1077 = vmatprep.subr.bf16.mxu0 0
        %1078 = vmatpush2.bf16.msra.mxu0 0
        %1079 = vmatprep.mubr.bf16.mxu0 0
        %1080 = vmatmul.mubr.bf16.gmra.mxu0 %v813
        %v1081 = vpop.f32.mrf.mxu0
        %v1082 = vadd.f32 0.0, %v1081
        %v1083 = vpop.f32.mrf.mxu0
        %v1084 = vadd.f32 0.0, %v1083
        %v1085 = vpop.f32.mrf.mxu0
        %v1086 = vpop.f32.mrf.mxu0
        %1087 = vdwg.mxu0
        %v1088 = vpack.c.bf16 %v1041, %v1041
        %v1089 = vpack.c.bf16 %v1043, %v1043
        %v1090 = vpack.c.bf16 %v1082, %v1082
        %v1091 = vpack.c.bf16 %v1084, %v1084
        %v1093 = vrot.slane %v1089, 4
        %v1095 = vrot.slane %v1091, 4
        %vm1096 = vcmask 1043456
        %v1099 = vsel %vm1096, %v1088, %v1093
        %v1103 = vsel %vm1096, %v1090, %v1095
        %1105 = vmatprep.subr.bf16.mxu0 0
        %1106 = vmatpush1.bf16.xpose.msra.mxu0 0
        %1107 = vmatprep.subr.bf16.mxu0 0
        %1108 = vmatpush1.bf16.xpose.msra.mxu0 0
        %1109 = vmatprep.subr.bf16.mxu0 0
        %1110 = vmatpush1.bf16.xpose.msra.mxu0 0
        %1111 = vmatprep.subr.bf16.mxu0 0
        %1112 = vmatpush1.bf16.xpose.msra.mxu0 0
        %1113 = vmatprep.subr.bf16.mxu0 0
        %1114 = vmatpush1.bf16.xpose.msra.mxu0 0
        %1115 = vmatprep.subr.bf16.mxu0 0
        %1116 = vmatpush1.bf16.xpose.msra.mxu0 0
        %1117 = vmatprep.subr.bf16.mxu0 0
        %1118 = vmatpush1.bf16.xpose.msra.mxu0 0
        %1119 = vmatprep.subr.bf16.mxu0 0
        %1120 = vmatpush1.bf16.xpose.msra.mxu0 %v812
        %1121 = vmatprep.subr.bf16.mxu0 0
        %1122 = vmatpush2.bf16.xpose.msra.mxu0 0
        %1123 = vmatprep.subr.bf16.mxu0 0
        %1124 = vmatpush2.bf16.xpose.msra.mxu0 0
        %1125 = vmatprep.subr.bf16.mxu0 0
        %1126 = vmatpush2.bf16.xpose.msra.mxu0 0
        %1127 = vmatprep.subr.bf16.mxu0 0
        %1128 = vmatpush2.bf16.xpose.msra.mxu0 0
        %1129 = vmatprep.subr.bf16.mxu0 0
        %1130 = vmatpush2.bf16.xpose.msra.mxu0 0
        %1131 = vmatprep.subr.bf16.mxu0 0
        %1132 = vmatpush2.bf16.xpose.msra.mxu0 0
        %1133 = vmatprep.subr.bf16.mxu0 0
        %1134 = vmatpush2.bf16.xpose.msra.mxu0 0
        %1135 = vmatprep.subr.bf16.mxu0 0
        %1136 = vmatpush2.bf16.xpose.msra.mxu0 0
        %1137 = vmatprep.mubr.bf16.mxu0 0
        %1138 = vmatmul.mubr.bf16.gmra.mxu0 %v1099
        %v1139 = vpop.f32.mrf.mxu0
        %v1140 = vadd.f32 0.0, %v1139
        %v1141 = vpop.f32.mrf.mxu0
        %v1142 = vpop.f32.mrf.mxu0
        %v1143 = vadd.f32 0.0, %v1142
        %v1144 = vpop.f32.mrf.mxu0
        %1145 = vmatprep.mubr.bf16.mxu0 0
        %1146 = vmatmul.mubr.bf16.gmra.mxu0 %v1103
        %v1147 = vpop.f32.mrf.mxu0
        %v1148 = vadd.f32 0.0, %v1147
        %v1149 = vpop.f32.mrf.mxu0
        %v1150 = vpop.f32.mrf.mxu0
        %v1151 = vadd.f32 0.0, %v1150
        %v1152 = vpop.f32.mrf.mxu0
        %1153 = vdwg.mxu0
        %v1154 = vpack.c.bf16 %v1143, %v1140
        %v1155 = vpack.c.bf16 %v1151, %v1148
        %v1158 = vunpack.c.l.b16 %v1154
        %v1159 = vunpack.c.h.b16 %v1154
        %v1160 = vunpack.c.l.b16 %v1155
        %v1161 = vunpack.c.h.b16 %v1155
        %v1162 = vpack.c.b16 %v1158, %v1158
        %v1163 = vpack.c.b16 %v1159, %v1159
        %v1164 = vpack.c.b16 %v1160, %v1160
        %v1165 = vpack.c.b16 %v1161, %v1161
        %vm1170 = vcmask 60416
        %1171 = vst.msk [vmem:[%s414] sm:$0xf] %vm1170, %v1162
        %1172 = vst.msk [vmem:[%s414 + $0x4] sm:$0xf] %vm1170, %v1163
        %1173 = vst.msk [vmem:[%s414 + $0x8] sm:$0xf] %vm1170, %v1164
        %1174 = vst.msk [vmem:[%s414 + $0xc] sm:$0xf] %vm1170, %v1165
        %s1175 = sand.u32 %s190, 1
        %s1176 = scalar_lea.sflag [#allocation5], %s1175
        %s1177 = sand.u32 %s190, 1
        %s1178 = smul.addr %s1177, 8
        %s1179 = scalar_lea.vmem [#allocation12], %s1178
        %s1180 = smul.u32 4, %s34
        %p1181 = scmp.lt.s32.totalorder %s33, 1
        %s1182 = scalar_select %p1181, %s33, 1
        %p1183 = scmp.lt.s32.totalorder %s1180, 3
        %s1184 = scalar_select %p1183, %s1180, 3
        %s1185 = smul.addr %s1182, 4
        %s1186 = sadd.s32 %s1184, %s1185
        %s1187 = smul.addr %s1186, 4
        %s1188 = scalar_lea.vmem %s7, %s1187
        // Predicated region
        $region69: #{tpu_custom_call.1} parent=43 // pred_check
          %p1189 = pneg %p200
        $region70: #{tpu_custom_call.1} parent=43 // pred_check_branch
          %1191 = sbr.rel (%p1189) target = $region72
        $region71: #{tpu_custom_call.1} parent=43 // pred_region
          %s1193 = ssub.s32 128, 128
          %1194 = vsyncadd %s1176, %s1193
          %s1195 = smul.addr %s33, 128
          %s1196 = scalar_lea.hbm %s6, %s1195
          %s1198 = sshll.u32 %s1179, 4
          %s1199 = int_to_ptr.vmem [resolvable:$true] %s1198
          %1201 = dma.vmem_to_hbm [thread:$0]  %s1199, 128, %s1196, %s1176
        $region72: #{tpu_custom_call.1} parent=43 // pred_fallthru
          _
        // Predicated region
        $region73: #{tpu_custom_call.1} parent=43 // pred_check
          %p1202 = pneg %p228
        $region74: #{tpu_custom_call.1} parent=43 // pred_check_branch
          %1204 = sbr.rel (%p1202) target = $region76
        $region75: #{tpu_custom_call.1} parent=43 // pred_region
          %s1205 = smul.u32 4, %s34
        $region76: #{tpu_custom_call.1} parent=43 // pred_fallthru
          _
      $region44: #{tpu_custom_call.1} parent=5 // pred_fallthru
        _
      %p1206 = scmp.le.s32.totalorder 2, %s24
      // Predicated region
      $region77: #{tpu_custom_call.1} parent=5 // pred_check
        %p1207 = pneg %p1206
      $region78: #{tpu_custom_call.1} parent=5 // pred_check_branch
        %1209 = sbr.rel (%p1207) target = $region80
      $region79: #{tpu_custom_call.1} parent=5 // pred_region
        %s1210 = ssub.s32 %s24, 2
        // Predicated region
        $region81: #{tpu_custom_call.1} parent=79 // pred_check
          %p1211 = pneg %p206
        $region82: #{tpu_custom_call.1} parent=79 // pred_check_branch
          %1213 = sbr.rel (%p1211) target = $region84
        $region83: #{tpu_custom_call.1} parent=79 // pred_region
          %s1214 = sand.u32 %s191, 1
          %s1215 = scalar_lea.sflag [#allocation5], %s1214
          %s1216 = sand.u32 %s191, 1
          %s1217 = smul.addr %s1216, 8
          %s1218 = scalar_lea.vmem [#allocation12], %s1217
          %1219 = dma.done %s1215, 128
        $region84: #{tpu_custom_call.1} parent=79 // pred_fallthru
          _
        // Predicated region
        $region85: #{tpu_custom_call.1} parent=79 // pred_check
          %p1220 = pneg %p234
        $region86: #{tpu_custom_call.1} parent=79 // pred_check_branch
          %1222 = sbr.rel (%p1220) target = $region88
        $region87: #{tpu_custom_call.1} parent=79 // pred_region
          %s1223 = smul.u32 4, %s36
          %p1224 = scmp.lt.s32.totalorder %s35, 1
          %s1225 = scalar_select %p1224, %s35, 1
          %p1226 = scmp.lt.s32.totalorder %s1223, 3
          %s1227 = scalar_select %p1226, %s1223, 3
          %s1228 = smul.addr %s1225, 4
          %s1229 = sadd.s32 %s1227, %s1228
          %s1230 = smul.addr %s1229, 4
          %s1231 = scalar_lea.vmem %s7, %s1230
        $region88: #{tpu_custom_call.1} parent=79 // pred_fallthru
          _
      $region80: #{tpu_custom_call.1} parent=5 // pred_fallthru
        _
    $region6: #{tpu_custom_call.1} parent=1 // loop_footer
      %s28 = sadd.s32 1, %s24
    $region7: #{tpu_custom_call.1} parent=1 // loop_footer_branch
      %23 = sbr.rel target = $region3
    $region8: #{tpu_custom_call.1} parent=1 // loop_exit
      _
    %1232 = vsyncpa [#allocation4], 1
    %s1233 = scalar_lea.sflag [#allocation4], 1
    %1234 = vsyncpa %s1233, 1
    %1235 = vsyncpa [#allocation7], 1
    %s1236 = scalar_lea.sflag [#allocation7], 1
    %1237 = vsyncpa %s1236, 1
    %1238 = vsyncpa [#allocation10], 1
    %1239 = vsyncpa [#allocation5], 1
    %s1240 = scalar_lea.sflag [#allocation5], 1
    %1241 = vsyncpa %s1240, 1

</llo_original>
